<compile_context>
chip_gen: v5e
topology: v5e:2x2
jax: 0.10.0
libtpu: 0.0.40
codegen_flags: <defaults>
</compile_context>

<pallas_src>
import functools
import math

import jax
import jax.numpy as jnp
from jax.experimental import pallas as pl
from jax.experimental.pallas import tpu as pltpu

# ---------------- scaled-down DistilBERT config ----------------
VOCAB = 100
MAX_POS = 64
D_MODEL = 128          # hidden size (768 in real DistilBERT)
N_HEADS = 4            # (12 in real DistilBERT)
HEAD_DIM = D_MODEL // N_HEADS
FFN_DIM = 256          # (3072 in real DistilBERT)
N_LAYERS = 2           # (6 in real DistilBERT)
N_CLASSES = 2
C_PAD = 128            # lane-dense padding for the classifier output
EPS = 1e-12            # DistilBERT LayerNorm eps


# ---------------- in-kernel helpers (f32 math) ----------------
def _gelu(x):
    # TODO(synk): DistilBERT uses exact erf-GELU; tanh approximation kept for Mosaic-safe lowering.
    return jax.nn.gelu(x, approximate=True)


def _ln(x, g, b):
    # One-pass statistics (E[x], E[x^2]) -> no serialized dependency between reductions.
    mu = jnp.mean(x, axis=-1, keepdims=True)
    ms = jnp.mean(x * x, axis=-1, keepdims=True)
    var = ms - mu * mu
    return (x - mu) * jax.lax.rsqrt(var + EPS) * g + b


# ---------------- single fused encoder + classifier kernel ----------------
def encoder_kernel(x_ref, mask_ref, embg_ref, embb_ref,
                   wqkv_ref, bqkv_ref, wo_ref, bo_ref,
                   ln1g_ref, ln1b_ref, w1_ref, b1_ref, w2_ref, b2_ref,
                   ln2g_ref, ln2b_ref, wc_ref, bc_ref,
                   logits_ref, probs_ref, h_ref,
                   *, n_heads, head_dim, scale, n_classes):
    """Grid axis = layer index. h_ref (VMEM scratch) carries the hidden state."""
    layer = pl.program_id(0)
    d_model = n_heads * head_dim

    # Grid step 0: embedding LayerNorm (fused, avoids a separate tiny launch).
    @pl.when(layer == 0)
    def _init():
        x0 = x_ref[...].astype(jnp.float32)
        h_ref[...] = _ln(x0, embg_ref[...], embb_ref[...])

    x = h_ref[...]                                    # (BS, D) f32 residual
    x_bf = x.astype(jnp.bfloat16)
    mask = mask_ref[...]                              # (BS, BS) block-diag + padding mask

    # Fused QKV projection over ALL B*S rows: (BS, D) @ (D, 3D), f32 accumulate.
    qkv = jnp.dot(x_bf, wqkv_ref[...],
                  preferred_element_type=jnp.float32) + bqkv_ref[...]
    qkv_bf = qkv.astype(jnp.bfloat16)                 # cast once, not per head
    q = qkv_bf[:, :d_model]
    k = qkv_bf[:, d_model:2 * d_model]
    v = qkv_bf[:, 2 * d_model:]

    # Per-head attention on the full (BS, BS) score tile; block-diagonal mask keeps
    # batches independent. Contexts concatenated -> ONE K=128 output projection.
    # TODO(synk): at real dims put heads on a leading axis so score matmuls are lane-aligned.
    ctx_heads = []
    for hh in range(n_heads):
        lo = hh * head_dim
        qh = q[:, lo:lo + head_dim]
        kh = k[:, lo:lo + head_dim]
        vh = v[:, lo:lo + head_dim]
        s = jax.lax.dot_general(qh, kh, (((1,), (1,)), ((), ())),
                                preferred_element_type=jnp.float32) * scale
        s = s + mask
        s = s - jnp.max(s, axis=-1, keepdims=True)
        p = jnp.exp(s)
        inv = pl.reciprocal(jnp.sum(p, axis=-1, keepdims=True), approx=True)  # EUP slot
        p = p * inv
        ctx_heads.append(jnp.dot(p.astype(jnp.bfloat16), vh,
                                 preferred_element_type=jnp.float32))
    ctx = jnp.concatenate(ctx_heads, axis=-1)         # (BS, D) f32

    attn = jnp.dot(ctx.astype(jnp.bfloat16), wo_ref[...],
                   preferred_element_type=jnp.float32) + bo_ref[...]

    # sa_layer_norm (post-LN residual), f32 statistics.
    h1 = _ln(attn + x, ln1g_ref[...], ln1b_ref[...])

    # Feed-forward: w1 + GELU + w2, bf16 matmuls with f32 accumulation.
    f = jnp.dot(h1.astype(jnp.bfloat16), w1_ref[...],
                preferred_element_type=jnp.float32) + b1_ref[...]
    f = _gelu(f)
    f = jnp.dot(f.astype(jnp.bfloat16), w2_ref[...],
                preferred_element_type=jnp.float32) + b2_ref[...]

    # output_layer_norm (post-LN residual); carry to next grid step.
    h2 = _ln(f + h1, ln2g_ref[...], ln2b_ref[...])
    h_ref[...] = h2

    # Last grid step: classifier + softmax (dropout p=0.3 is identity at inference).
    # Logits computed for all BS rows so the (BS, 128) store is lane/sublane dense;
    # CLS rows are sliced out in glue.
    @pl.when(layer == pl.num_programs(0) - 1)
    def _classify():
        logits = jnp.dot(h2.astype(jnp.bfloat16), wc_ref[...],
                         preferred_element_type=jnp.float32) + bc_ref[...]
        logits_ref[...] = logits
        col = jax.lax.broadcasted_iota(jnp.int32, logits.shape, 1)
        z = jnp.where(col < n_classes, logits, -1e30)   # mask the padded classes
        z = z - jnp.max(z, axis=-1, keepdims=True)
        e = jnp.exp(z)
        # Exact division here (runs once per forward) so sum(probs) == 1 tightly.
        probs_ref[...] = e / jnp.sum(e, axis=-1, keepdims=True)


# ---------------- parameter init (deterministic, synthetic, L-stacked) ----------------
def init_params(key):
    keys = iter(jax.random.split(key, 32))
    bf = jnp.bfloat16

    def nrm(shape):
        return (0.02 * jax.random.normal(next(keys), shape)).astype(jnp.float32)

    def zeros(shape):
        return jnp.zeros(shape, jnp.float32)

    def ones(shape):
        return jnp.ones(shape, jnp.float32)

    wc = nrm((D_MODEL, N_CLASSES))
    wc_pad = jnp.zeros((D_MODEL, C_PAD), jnp.float32).at[:, :N_CLASSES].set(wc).astype(bf)

    return {
        "word_emb": nrm((VOCAB, D_MODEL)),
        "pos_emb": nrm((MAX_POS, D_MODEL)),
        "emb_ln_g": ones((1, D_MODEL)),
        "emb_ln_b": zeros((1, D_MODEL)),
        # Per-layer weights stacked on a leading L axis -> one pallas_call runs the
        # whole encoder and BlockSpec pipelining prefetches the next layer's weights.
        "wqkv": nrm((N_LAYERS, D_MODEL, 3 * D_MODEL)).astype(bf),
        "bqkv": zeros((N_LAYERS, 1, 3 * D_MODEL)),
        "wo": nrm((N_LAYERS, D_MODEL, D_MODEL)).astype(bf),
        "bo": zeros((N_LAYERS, 1, D_MODEL)),
        "ln1_g": ones((N_LAYERS, 1, D_MODEL)),
        "ln1_b": zeros((N_LAYERS, 1, D_MODEL)),
        "w1": nrm((N_LAYERS, D_MODEL, FFN_DIM)).astype(bf),
        "b1": zeros((N_LAYERS, 1, FFN_DIM)),
        "w2": nrm((N_LAYERS, FFN_DIM, D_MODEL)).astype(bf),
        "b2": zeros((N_LAYERS, 1, D_MODEL)),
        "ln2_g": ones((N_LAYERS, 1, D_MODEL)),
        "ln2_b": zeros((N_LAYERS, 1, D_MODEL)),
        "wc_pad": wc_pad,
        "bc_pad": zeros((1, C_PAD)),
    }


# ---------------- forward (glue in JAX, everything hot in ONE Pallas kernel) ----------------
def distilbert_classifier_forward(params, input_ids, attention_mask):
    B, S = input_ids.shape
    BS = B * S

    # Embedding gathers are glue; everything downstream is one fused kernel.
    positions = jnp.arange(S)
    emb = params["word_emb"][input_ids] + params["pos_emb"][positions][None, :, :]
    x = emb.reshape(BS, D_MODEL).astype(jnp.float32)

    # Additive mask over flattened rows: 0 where key j is a valid token of the SAME
    # batch as query i, -1e9 otherwise (block-diagonal + padding in one tensor).
    # NOTE: an all-padding sequence yields a near-uniform softmax (same edge case the
    # PyTorch masked_fill path hits), documented rather than special-cased.
    batch_idx = jnp.repeat(jnp.arange(B), S)
    same_batch = batch_idx[:, None] == batch_idx[None, :]
    valid = attention_mask.reshape(BS).astype(bool)
    add_mask = jnp.where(same_batch & valid[None, :], 0.0, -1e9).astype(jnp.float32)

    def stacked(arr):
        nd = arr.ndim
        return pl.BlockSpec((None,) + arr.shape[1:],
                            lambda l, _nd=nd: (l,) + (0,) * (_nd - 1))

    def full(arr):
        nd = arr.ndim
        return pl.BlockSpec(arr.shape, lambda l, _nd=nd: (0,) * _nd)

    p = params
    logits_pad, probs_pad = pl.pallas_call(
        functools.partial(encoder_kernel, n_heads=N_HEADS, head_dim=HEAD_DIM,
                          scale=1.0 / math.sqrt(HEAD_DIM), n_classes=N_CLASSES),
        out_shape=(jax.ShapeDtypeStruct((BS, C_PAD), jnp.float32),
                   jax.ShapeDtypeStruct((BS, C_PAD), jnp.float32)),
        grid=(N_LAYERS,),
        in_specs=[full(x), full(add_mask),
                  full(p["emb_ln_g"]), full(p["emb_ln_b"]),
                  stacked(p["wqkv"]), stacked(p["bqkv"]),
                  stacked(p["wo"]), stacked(p["bo"]),
                  stacked(p["ln1_g"]), stacked(p["ln1_b"]),
                  stacked(p["w1"]), stacked(p["b1"]),
                  stacked(p["w2"]), stacked(p["b2"]),
                  stacked(p["ln2_g"]), stacked(p["ln2_b"]),
                  full(p["wc_pad"]), full(p["bc_pad"])],
        out_specs=(pl.BlockSpec((BS, C_PAD), lambda l: (0, 0)),
                   pl.BlockSpec((BS, C_PAD), lambda l: (0, 0))),
        scratch_shapes=[pltpu.VMEM((BS, D_MODEL), jnp.float32)],
        compiler_params=pltpu.CompilerParams(
            dimension_semantics=("arbitrary",)),
    )(x, add_mask, p["emb_ln_g"], p["emb_ln_b"],
      p["wqkv"], p["bqkv"], p["wo"], p["bo"],
      p["ln1_g"], p["ln1_b"], p["w1"], p["b1"], p["w2"], p["b2"],
      p["ln2_g"], p["ln2_b"], p["wc_pad"], p["bc_pad"])

    # CLS pooling (outputs[0][:, 0]) and real-class slicing happen in glue.
    logits = logits_pad.reshape(B, S, C_PAD)[:, 0, :N_CLASSES]
    probs = probs_pad.reshape(B, S, C_PAD)[:, 0, :N_CLASSES]
    return logits, probs


if __name__ == "__main__":
    B, S = 2, 8
    params = init_params(jax.random.PRNGKey(0))
    input_ids = jax.random.randint(jax.random.PRNGKey(1), (B, S), 0, VOCAB, dtype=jnp.int32)
    # Second sequence has 2 padding tokens at the end.
    attention_mask = jnp.ones((B, S), dtype=jnp.int32).at[1, 6:].set(0)

    fwd = jax.jit(distilbert_classifier_forward)
    logits, probs = fwd(params, input_ids, attention_mask)
    jax.block_until_ready((logits, probs))

    assert logits.shape == (B, N_CLASSES) and probs.shape == (B, N_CLASSES)
    assert bool(jnp.all(jnp.isfinite(logits))) and bool(jnp.all(jnp.isfinite(probs)))
    assert bool(jnp.allclose(jnp.sum(probs, axis=-1), 1.0, atol=1e-5))
    print("KERNEL_OK")
</pallas_src>

<mosaic_0001>
module attributes {stable_mosaic.version = 11 : i64} {
  func.func @encoder_kernel(%arg0: i32, %arg1: memref<16x128xf32, #tpu.memory_space<vmem>>, %arg2: memref<16x16xf32, #tpu.memory_space<vmem>>, %arg3: memref<1x128xf32, #tpu.memory_space<vmem>>, %arg4: memref<1x128xf32, #tpu.memory_space<vmem>>, %arg5: memref<1x128x384xbf16, #tpu.memory_space<vmem>>, %arg6: memref<1x1x384xf32, #tpu.memory_space<vmem>>, %arg7: memref<1x128x128xbf16, #tpu.memory_space<vmem>>, %arg8: memref<1x1x128xf32, #tpu.memory_space<vmem>>, %arg9: memref<1x1x128xf32, #tpu.memory_space<vmem>>, %arg10: memref<1x1x128xf32, #tpu.memory_space<vmem>>, %arg11: memref<1x128x256xbf16, #tpu.memory_space<vmem>>, %arg12: memref<1x1x256xf32, #tpu.memory_space<vmem>>, %arg13: memref<1x256x128xbf16, #tpu.memory_space<vmem>>, %arg14: memref<1x1x128xf32, #tpu.memory_space<vmem>>, %arg15: memref<1x1x128xf32, #tpu.memory_space<vmem>>, %arg16: memref<1x1x128xf32, #tpu.memory_space<vmem>>, %arg17: memref<128x128xbf16, #tpu.memory_space<vmem>>, %arg18: memref<1x128xf32, #tpu.memory_space<vmem>>, %arg19: memref<16x128xf32, #tpu.memory_space<vmem>>, %arg20: memref<16x128xf32, #tpu.memory_space<vmem>>, %arg21: memref<16x128xf32, #tpu.memory_space<vmem>>) attributes {dimension_semantics = [#tpu.dimension_semantics<arbitrary>], iteration_bounds = array<i64: 2>, scalar_prefetch = 0 : i64, scratch_operands = 1 : i64, tpu.core_type = #tpu.core_type<tc>, window_params = [{pipeline_mode = #tpu.pipeline_mode<synchronous>, transform_indices = @transform_0, window_bounds = array<i64: 16, 128>}, {pipeline_mode = #tpu.pipeline_mode<synchronous>, transform_indices = @transform_1, window_bounds = array<i64: 16, 16>}, {pipeline_mode = #tpu.pipeline_mode<synchronous>, transform_indices = @transform_2, window_bounds = array<i64: 1, 128>}, {pipeline_mode = #tpu.pipeline_mode<synchronous>, transform_indices = @transform_3, window_bounds = array<i64: 1, 128>}, {transform_indices = @transform_4, window_bounds = array<i64: 1, 128, 384>}, {transform_indices = @transform_5, window_bounds = array<i64: 1, 1, 384>}, {transform_indices = @transform_6, window_bounds = array<i64: 1, 128, 128>}, {transform_indices = @transform_7, window_bounds = array<i64: 1, 1, 128>}, {transform_indices = @transform_8, window_bounds = array<i64: 1, 1, 128>}, {transform_indices = @transform_9, window_bounds = array<i64: 1, 1, 128>}, {transform_indices = @transform_10, window_bounds = array<i64: 1, 128, 256>}, {transform_indices = @transform_11, window_bounds = array<i64: 1, 1, 256>}, {transform_indices = @transform_12, window_bounds = array<i64: 1, 256, 128>}, {transform_indices = @transform_13, window_bounds = array<i64: 1, 1, 128>}, {transform_indices = @transform_14, window_bounds = array<i64: 1, 1, 128>}, {transform_indices = @transform_15, window_bounds = array<i64: 1, 1, 128>}, {pipeline_mode = #tpu.pipeline_mode<synchronous>, transform_indices = @transform_16, window_bounds = array<i64: 128, 128>}, {pipeline_mode = #tpu.pipeline_mode<synchronous>, transform_indices = @transform_17, window_bounds = array<i64: 1, 128>}, {pipeline_mode = #tpu.pipeline_mode<synchronous>, transform_indices = @transform_18, window_bounds = array<i64: 16, 128>}, {pipeline_mode = #tpu.pipeline_mode<synchronous>, transform_indices = @transform_19, window_bounds = array<i64: 16, 128>}]} {
    %c0_i32 = arith.constant 0 : i32
    %0 = arith.cmpi eq, %arg0, %c0_i32 : i32
    %1 = arith.extui %0 : i1 to i32
    %c0_i32_0 = arith.constant 0 : i32
    %2 = arith.cmpi ne, %1, %c0_i32_0 : i32
    scf.if %2 {
      %c0_80 = arith.constant 0 : index
      %c0_81 = arith.constant 0 : index
      %189 = vector.load %arg1[%c0_80, %c0_81] : memref<16x128xf32, #tpu.memory_space<vmem>>, vector<16x128xf32>
      %c0_82 = arith.constant 0 : index
      %c0_83 = arith.constant 0 : index
      %190 = vector.load %arg3[%c0_82, %c0_83] : memref<1x128xf32, #tpu.memory_space<vmem>>, vector<1x128xf32>
      %c0_84 = arith.constant 0 : index
      %c0_85 = arith.constant 0 : index
      %191 = vector.load %arg4[%c0_84, %c0_85] : memref<1x128xf32, #tpu.memory_space<vmem>>, vector<1x128xf32>
      %cst_86 = arith.constant dense<0.000000e+00> : vector<16xf32>
      %192 = vector.multi_reduction <add>, %189, %cst_86 [1] : vector<16x128xf32> to vector<16xf32>
      %193 = vector.shape_cast %192 : vector<16xf32> to vector<16x1xf32>
      %cst_87 = arith.constant 1.280000e+02 : f32
      %194 = vector.broadcast %cst_87 : f32 to vector<16x1xf32>
      %195 = arith.divf %193, %194 : vector<16x1xf32>
      %196 = arith.mulf %189, %189 : vector<16x128xf32>
      %cst_88 = arith.constant dense<0.000000e+00> : vector<16xf32>
      %197 = vector.multi_reduction <add>, %196, %cst_88 [1] : vector<16x128xf32> to vector<16xf32>
      %198 = vector.shape_cast %197 : vector<16xf32> to vector<16x1xf32>
      %cst_89 = arith.constant 1.280000e+02 : f32
      %199 = vector.broadcast %cst_89 : f32 to vector<16x1xf32>
      %200 = arith.divf %198, %199 : vector<16x1xf32>
      %201 = arith.mulf %195, %195 : vector<16x1xf32>
      %202 = arith.subf %200, %201 : vector<16x1xf32>
      %203 = vector.broadcast %195 : vector<16x1xf32> to vector<16x128xf32>
      %204 = arith.subf %189, %203 : vector<16x128xf32>
      %cst_90 = arith.constant 9.99999996E-13 : f32
      %205 = vector.broadcast %cst_90 : f32 to vector<16x1xf32>
      %206 = arith.addf %202, %205 : vector<16x1xf32>
      %207 = math.rsqrt %206 : vector<16x1xf32>
      %208 = vector.broadcast %207 : vector<16x1xf32> to vector<16x128xf32>
      %209 = arith.mulf %204, %208 : vector<16x128xf32>
      %210 = vector.broadcast %190 : vector<1x128xf32> to vector<16x128xf32>
      %211 = arith.mulf %209, %210 : vector<16x128xf32>
      %212 = vector.broadcast %191 : vector<1x128xf32> to vector<16x128xf32>
      %213 = arith.addf %211, %212 : vector<16x128xf32>
      %c0_91 = arith.constant 0 : index
      %c0_92 = arith.constant 0 : index
      %214 = vector.load %arg21[%c0_91, %c0_92] : memref<16x128xf32, #tpu.memory_space<vmem>>, vector<16x128xf32>
      tpu.vector_store %arg21[%c0_91, %c0_92], %213 {strides = array<i32>} : memref<16x128xf32, #tpu.memory_space<vmem>>, vector<16x128xf32>,
    } else {
    }
    %c0 = arith.constant 0 : index
    %c0_1 = arith.constant 0 : index
    %3 = vector.load %arg21[%c0, %c0_1] : memref<16x128xf32, #tpu.memory_space<vmem>>, vector<16x128xf32>
    %4 = arith.truncf %3 : vector<16x128xf32> to vector<16x128xbf16>
    %c0_2 = arith.constant 0 : index
    %c0_3 = arith.constant 0 : index
    %5 = vector.load %arg2[%c0_2, %c0_3] : memref<16x16xf32, #tpu.memory_space<vmem>>, vector<16x16xf32>
    %c0_4 = arith.constant 0 : index
    %c0_5 = arith.constant 0 : index
    %c0_6 = arith.constant 0 : index
    %6 = vector.load %arg5[%c0_4, %c0_5, %c0_6] : memref<1x128x384xbf16, #tpu.memory_space<vmem>>, vector<1x128x384xbf16>
    %7 = vector.shape_cast %6 : vector<1x128x384xbf16> to vector<128x384xbf16>
    %cst = arith.constant dense<0.000000e+00> : vector<16x384xf32>
    %8 = tpu.matmul %4, %7, %cst {dimension_numbers = #tpu.dot_dimension_numbers<[1], [0], [0], [1], [0, 0, 1, 1], [], []>} : vector<16x128xbf16>, vector<128x384xbf16>, vector<16x384xf32> -> vector<16x384xf32>
    %c0_7 = arith.constant 0 : index
    %c0_8 = arith.constant 0 : index
    %c0_9 = arith.constant 0 : index
    %9 = vector.load %arg6[%c0_7, %c0_8, %c0_9] : memref<1x1x384xf32, #tpu.memory_space<vmem>>, vector<1x1x384xf32>
    %10 = vector.shape_cast %9 : vector<1x1x384xf32> to vector<1x384xf32>
    %11 = vector.broadcast %10 : vector<1x384xf32> to vector<16x384xf32>
    %12 = arith.addf %8, %11 : vector<16x384xf32>
    %13 = arith.truncf %12 : vector<16x384xf32> to vector<16x384xbf16>
    %14 = vector.extract_strided_slice %13 {offsets = [0, 0], sizes = [16, 128], strides = [1, 1]} : vector<16x384xbf16> to vector<16x128xbf16>
    %15 = vector.extract_strided_slice %13 {offsets = [0, 128], sizes = [16, 128], strides = [1, 1]} : vector<16x384xbf16> to vector<16x128xbf16>
    %16 = vector.extract_strided_slice %13 {offsets = [0, 256], sizes = [16, 128], strides = [1, 1]} : vector<16x384xbf16> to vector<16x128xbf16>
    %17 = vector.extract_strided_slice %14 {offsets = [0, 0], sizes = [16, 32], strides = [1, 1]} : vector<16x128xbf16> to vector<16x32xbf16>
    %18 = vector.extract_strided_slice %15 {offsets = [0, 0], sizes = [16, 32], strides = [1, 1]} : vector<16x128xbf16> to vector<16x32xbf16>
    %19 = vector.extract_strided_slice %16 {offsets = [0, 0], sizes = [16, 32], strides = [1, 1]} : vector<16x128xbf16> to vector<16x32xbf16>
    %cst_10 = arith.constant dense<0.000000e+00> : vector<16x16xf32>
    %20 = tpu.matmul %17, %18, %cst_10 {dimension_numbers = #tpu.dot_dimension_numbers<[1], [1], [0], [0], [0, 0, 1, 0], [], []>} : vector<16x32xbf16>, vector<16x32xbf16>, vector<16x16xf32> -> vector<16x16xf32>
    %cst_11 = arith.constant 0.176776692 : f32
    %21 = vector.broadcast %cst_11 : f32 to vector<16x16xf32>
    %22 = arith.mulf %20, %21 : vector<16x16xf32>
    %23 = arith.addf %22, %5 : vector<16x16xf32>
    %cst_12 = arith.constant dense<0xFF800000> : vector<16xf32>
    %24 = vector.multi_reduction <maximumf>, %23, %cst_12 [1] : vector<16x16xf32> to vector<16xf32>
    %25 = vector.shape_cast %24 : vector<16xf32> to vector<16x1xf32>
    %26 = vector.broadcast %25 : vector<16x1xf32> to vector<16x16xf32>
    %27 = arith.subf %23, %26 : vector<16x16xf32>
    %28 = math.exp %27 : vector<16x16xf32>
    %cst_13 = arith.constant dense<0.000000e+00> : vector<16xf32>
    %29 = vector.multi_reduction <add>, %28, %cst_13 [1] : vector<16x16xf32> to vector<16xf32>
    %30 = vector.shape_cast %29 : vector<16xf32> to vector<16x1xf32>
    %31 = tpu.reciprocal %30 {approx = true} : vector<16x1xf32> -> vector<16x1xf32>
    %32 = vector.broadcast %31 : vector<16x1xf32> to vector<16x16xf32>
    %33 = arith.mulf %28, %32 : vector<16x16xf32>
    %34 = arith.truncf %33 : vector<16x16xf32> to vector<16x16xbf16>
    %cst_14 = arith.constant dense<0.000000e+00> : vector<16x32xf32>
    %35 = tpu.matmul %34, %19, %cst_14 {dimension_numbers = #tpu.dot_dimension_numbers<[1], [0], [0], [1], [0, 0, 1, 1], [], []>} : vector<16x16xbf16>, vector<16x32xbf16>, vector<16x32xf32> -> vector<16x32xf32>
    %36 = vector.extract_strided_slice %14 {offsets = [0, 32], sizes = [16, 32], strides = [1, 1]} : vector<16x128xbf16> to vector<16x32xbf16>
    %37 = vector.extract_strided_slice %15 {offsets = [0, 32], sizes = [16, 32], strides = [1, 1]} : vector<16x128xbf16> to vector<16x32xbf16>
    %38 = vector.extract_strided_slice %16 {offsets = [0, 32], sizes = [16, 32], strides = [1, 1]} : vector<16x128xbf16> to vector<16x32xbf16>
    %cst_15 = arith.constant dense<0.000000e+00> : vector<16x16xf32>
    %39 = tpu.matmul %36, %37, %cst_15 {dimension_numbers = #tpu.dot_dimension_numbers<[1], [1], [0], [0], [0, 0, 1, 0], [], []>} : vector<16x32xbf16>, vector<16x32xbf16>, vector<16x16xf32> -> vector<16x16xf32>
    %cst_16 = arith.constant 0.176776692 : f32
    %40 = vector.broadcast %cst_16 : f32 to vector<16x16xf32>
    %41 = arith.mulf %39, %40 : vector<16x16xf32>
    %42 = arith.addf %41, %5 : vector<16x16xf32>
    %cst_17 = arith.constant dense<0xFF800000> : vector<16xf32>
    %43 = vector.multi_reduction <maximumf>, %42, %cst_17 [1] : vector<16x16xf32> to vector<16xf32>
    %44 = vector.shape_cast %43 : vector<16xf32> to vector<16x1xf32>
    %45 = vector.broadcast %44 : vector<16x1xf32> to vector<16x16xf32>
    %46 = arith.subf %42, %45 : vector<16x16xf32>
    %47 = math.exp %46 : vector<16x16xf32>
    %cst_18 = arith.constant dense<0.000000e+00> : vector<16xf32>
    %48 = vector.multi_reduction <add>, %47, %cst_18 [1] : vector<16x16xf32> to vector<16xf32>
    %49 = vector.shape_cast %48 : vector<16xf32> to vector<16x1xf32>
    %50 = tpu.reciprocal %49 {approx = true} : vector<16x1xf32> -> vector<16x1xf32>
    %51 = vector.broadcast %50 : vector<16x1xf32> to vector<16x16xf32>
    %52 = arith.mulf %47, %51 : vector<16x16xf32>
    %53 = arith.truncf %52 : vector<16x16xf32> to vector<16x16xbf16>
    %cst_19 = arith.constant dense<0.000000e+00> : vector<16x32xf32>
    %54 = tpu.matmul %53, %38, %cst_19 {dimension_numbers = #tpu.dot_dimension_numbers<[1], [0], [0], [1], [0, 0, 1, 1], [], []>} : vector<16x16xbf16>, vector<16x32xbf16>, vector<16x32xf32> -> vector<16x32xf32>
    %55 = vector.extract_strided_slice %14 {offsets = [0, 64], sizes = [16, 32], strides = [1, 1]} : vector<16x128xbf16> to vector<16x32xbf16>
    %56 = vector.extract_strided_slice %15 {offsets = [0, 64], sizes = [16, 32], strides = [1, 1]} : vector<16x128xbf16> to vector<16x32xbf16>
    %57 = vector.extract_strided_slice %16 {offsets = [0, 64], sizes = [16, 32], strides = [1, 1]} : vector<16x128xbf16> to vector<16x32xbf16>
    %cst_20 = arith.constant dense<0.000000e+00> : vector<16x16xf32>
    %58 = tpu.matmul %55, %56, %cst_20 {dimension_numbers = #tpu.dot_dimension_numbers<[1], [1], [0], [0], [0, 0, 1, 0], [], []>} : vector<16x32xbf16>, vector<16x32xbf16>, vector<16x16xf32> -> vector<16x16xf32>
    %cst_21 = arith.constant 0.176776692 : f32
    %59 = vector.broadcast %cst_21 : f32 to vector<16x16xf32>
    %60 = arith.mulf %58, %59 : vector<16x16xf32>
    %61 = arith.addf %60, %5 : vector<16x16xf32>
    %cst_22 = arith.constant dense<0xFF800000> : vector<16xf32>
    %62 = vector.multi_reduction <maximumf>, %61, %cst_22 [1] : vector<16x16xf32> to vector<16xf32>
    %63 = vector.shape_cast %62 : vector<16xf32> to vector<16x1xf32>
    %64 = vector.broadcast %63 : vector<16x1xf32> to vector<16x16xf32>
    %65 = arith.subf %61, %64 : vector<16x16xf32>
    %66 = math.exp %65 : vector<16x16xf32>
    %cst_23 = arith.constant dense<0.000000e+00> : vector<16xf32>
    %67 = vector.multi_reduction <add>, %66, %cst_23 [1] : vector<16x16xf32> to vector<16xf32>
    %68 = vector.shape_cast %67 : vector<16xf32> to vector<16x1xf32>
    %69 = tpu.reciprocal %68 {approx = true} : vector<16x1xf32> -> vector<16x1xf32>
    %70 = vector.broadcast %69 : vector<16x1xf32> to vector<16x16xf32>
    %71 = arith.mulf %66, %70 : vector<16x16xf32>
    %72 = arith.truncf %71 : vector<16x16xf32> to vector<16x16xbf16>
    %cst_24 = arith.constant dense<0.000000e+00> : vector<16x32xf32>
    %73 = tpu.matmul %72, %57, %cst_24 {dimension_numbers = #tpu.dot_dimension_numbers<[1], [0], [0], [1], [0, 0, 1, 1], [], []>} : vector<16x16xbf16>, vector<16x32xbf16>, vector<16x32xf32> -> vector<16x32xf32>
    %74 = vector.extract_strided_slice %14 {offsets = [0, 96], sizes = [16, 32], strides = [1, 1]} : vector<16x128xbf16> to vector<16x32xbf16>
    %75 = vector.extract_strided_slice %15 {offsets = [0, 96], sizes = [16, 32], strides = [1, 1]} : vector<16x128xbf16> to vector<16x32xbf16>
    %76 = vector.extract_strided_slice %16 {offsets = [0, 96], sizes = [16, 32], strides = [1, 1]} : vector<16x128xbf16> to vector<16x32xbf16>
    %cst_25 = arith.constant dense<0.000000e+00> : vector<16x16xf32>
    %77 = tpu.matmul %74, %75, %cst_25 {dimension_numbers = #tpu.dot_dimension_numbers<[1], [1], [0], [0], [0, 0, 1, 0], [], []>} : vector<16x32xbf16>, vector<16x32xbf16>, vector<16x16xf32> -> vector<16x16xf32>
    %cst_26 = arith.constant 0.176776692 : f32
    %78 = vector.broadcast %cst_26 : f32 to vector<16x16xf32>
    %79 = arith.mulf %77, %78 : vector<16x16xf32>
    %80 = arith.addf %79, %5 : vector<16x16xf32>
    %cst_27 = arith.constant dense<0xFF800000> : vector<16xf32>
    %81 = vector.multi_reduction <maximumf>, %80, %cst_27 [1] : vector<16x16xf32> to vector<16xf32>
    %82 = vector.shape_cast %81 : vector<16xf32> to vector<16x1xf32>
    %83 = vector.broadcast %82 : vector<16x1xf32> to vector<16x16xf32>
    %84 = arith.subf %80, %83 : vector<16x16xf32>
    %85 = math.exp %84 : vector<16x16xf32>
    %cst_28 = arith.constant dense<0.000000e+00> : vector<16xf32>
    %86 = vector.multi_reduction <add>, %85, %cst_28 [1] : vector<16x16xf32> to vector<16xf32>
    %87 = vector.shape_cast %86 : vector<16xf32> to vector<16x1xf32>
    %88 = tpu.reciprocal %87 {approx = true} : vector<16x1xf32> -> vector<16x1xf32>
    %89 = vector.broadcast %88 : vector<16x1xf32> to vector<16x16xf32>
    %90 = arith.mulf %85, %89 : vector<16x16xf32>
    %91 = arith.truncf %90 : vector<16x16xf32> to vector<16x16xbf16>
    %cst_29 = arith.constant dense<0.000000e+00> : vector<16x32xf32>
    %92 = tpu.matmul %91, %76, %cst_29 {dimension_numbers = #tpu.dot_dimension_numbers<[1], [0], [0], [1], [0, 0, 1, 1], [], []>} : vector<16x16xbf16>, vector<16x32xbf16>, vector<16x32xf32> -> vector<16x32xf32>
    %93 = tpu.concatenate %35, %54, %73, %92 in 1 : vector<16x32xf32>, vector<16x32xf32>, vector<16x32xf32>, vector<16x32xf32> -> vector<16x128xf32>
    %94 = arith.truncf %93 : vector<16x128xf32> to vector<16x128xbf16>
    %c0_30 = arith.constant 0 : index
    %c0_31 = arith.constant 0 : index
    %c0_32 = arith.constant 0 : index
    %95 = vector.load %arg7[%c0_30, %c0_31, %c0_32] : memref<1x128x128xbf16, #tpu.memory_space<vmem>>, vector<1x128x128xbf16>
    %96 = vector.shape_cast %95 : vector<1x128x128xbf16> to vector<128x128xbf16>
    %cst_33 = arith.constant dense<0.000000e+00> : vector<16x128xf32>
    %97 = tpu.matmul %94, %96, %cst_33 {dimension_numbers = #tpu.dot_dimension_numbers<[1], [0], [0], [1], [0, 0, 1, 1], [], []>} : vector<16x128xbf16>, vector<128x128xbf16>, vector<16x128xf32> -> vector<16x128xf32>
    %c0_34 = arith.constant 0 : index
    %c0_35 = arith.constant 0 : index
    %c0_36 = arith.constant 0 : index
    %98 = vector.load %arg8[%c0_34, %c0_35, %c0_36] : memref<1x1x128xf32, #tpu.memory_space<vmem>>, vector<1x1x128xf32>
    %99 = vector.shape_cast %98 : vector<1x1x128xf32> to vector<1x128xf32>
    %100 = vector.broadcast %99 : vector<1x128xf32> to vector<16x128xf32>
    %101 = arith.addf %97, %100 : vector<16x128xf32>
    %102 = arith.addf %101, %3 : vector<16x128xf32>
    %c0_37 = arith.constant 0 : index
    %c0_38 = arith.constant 0 : index
    %c0_39 = arith.constant 0 : index
    %103 = vector.load %arg9[%c0_37, %c0_38, %c0_39] : memref<1x1x128xf32, #tpu.memory_space<vmem>>, vector<1x1x128xf32>
    %104 = vector.shape_cast %103 : vector<1x1x128xf32> to vector<1x128xf32>
    %c0_40 = arith.constant 0 : index
    %c0_41 = arith.constant 0 : index
    %c0_42 = arith.constant 0 : index
    %105 = vector.load %arg10[%c0_40, %c0_41, %c0_42] : memref<1x1x128xf32, #tpu.memory_space<vmem>>, vector<1x1x128xf32>
    %106 = vector.shape_cast %105 : vector<1x1x128xf32> to vector<1x128xf32>
    %cst_43 = arith.constant dense<0.000000e+00> : vector<16xf32>
    %107 = vector.multi_reduction <add>, %102, %cst_43 [1] : vector<16x128xf32> to vector<16xf32>
    %108 = vector.shape_cast %107 : vector<16xf32> to vector<16x1xf32>
    %cst_44 = arith.constant 1.280000e+02 : f32
    %109 = vector.broadcast %cst_44 : f32 to vector<16x1xf32>
    %110 = arith.divf %108, %109 : vector<16x1xf32>
    %111 = arith.mulf %102, %102 : vector<16x128xf32>
    %cst_45 = arith.constant dense<0.000000e+00> : vector<16xf32>
    %112 = vector.multi_reduction <add>, %111, %cst_45 [1] : vector<16x128xf32> to vector<16xf32>
    %113 = vector.shape_cast %112 : vector<16xf32> to vector<16x1xf32>
    %cst_46 = arith.constant 1.280000e+02 : f32
    %114 = vector.broadcast %cst_46 : f32 to vector<16x1xf32>
    %115 = arith.divf %113, %114 : vector<16x1xf32>
    %116 = arith.mulf %110, %110 : vector<16x1xf32>
    %117 = arith.subf %115, %116 : vector<16x1xf32>
    %118 = vector.broadcast %110 : vector<16x1xf32> to vector<16x128xf32>
    %119 = arith.subf %102, %118 : vector<16x128xf32>
    %cst_47 = arith.constant 9.99999996E-13 : f32
    %120 = vector.broadcast %cst_47 : f32 to vector<16x1xf32>
    %121 = arith.addf %117, %120 : vector<16x1xf32>
    %122 = math.rsqrt %121 : vector<16x1xf32>
    %123 = vector.broadcast %122 : vector<16x1xf32> to vector<16x128xf32>
    %124 = arith.mulf %119, %123 : vector<16x128xf32>
    %125 = vector.broadcast %104 : vector<1x128xf32> to vector<16x128xf32>
    %126 = arith.mulf %124, %125 : vector<16x128xf32>
    %127 = vector.broadcast %106 : vector<1x128xf32> to vector<16x128xf32>
    %128 = arith.addf %126, %127 : vector<16x128xf32>
    %129 = arith.truncf %128 : vector<16x128xf32> to vector<16x128xbf16>
    %c0_48 = arith.constant 0 : index
    %c0_49 = arith.constant 0 : index
    %c0_50 = arith.constant 0 : index
    %130 = vector.load %arg11[%c0_48, %c0_49, %c0_50] : memref<1x128x256xbf16, #tpu.memory_space<vmem>>, vector<1x128x256xbf16>
    %131 = vector.shape_cast %130 : vector<1x128x256xbf16> to vector<128x256xbf16>
    %cst_51 = arith.constant dense<0.000000e+00> : vector<16x256xf32>
    %132 = tpu.matmul %129, %131, %cst_51 {dimension_numbers = #tpu.dot_dimension_numbers<[1], [0], [0], [1], [0, 0, 1, 1], [], []>} : vector<16x128xbf16>, vector<128x256xbf16>, vector<16x256xf32> -> vector<16x256xf32>
    %c0_52 = arith.constant 0 : index
    %c0_53 = arith.constant 0 : index
    %c0_54 = arith.constant 0 : index
    %133 = vector.load %arg12[%c0_52, %c0_53, %c0_54] : memref<1x1x256xf32, #tpu.memory_space<vmem>>, vector<1x1x256xf32>
    %134 = vector.shape_cast %133 : vector<1x1x256xf32> to vector<1x256xf32>
    %135 = vector.broadcast %134 : vector<1x256xf32> to vector<16x256xf32>
    %136 = arith.addf %132, %135 : vector<16x256xf32>
    %137 = arith.mulf %136, %136 : vector<16x256xf32>
    %138 = arith.mulf %136, %137 : vector<16x256xf32>
    %cst_55 = arith.constant 4.471500e-02 : f32
    %139 = vector.broadcast %cst_55 : f32 to vector<16x256xf32>
    %140 = arith.mulf %139, %138 : vector<16x256xf32>
    %141 = arith.addf %136, %140 : vector<16x256xf32>
    %cst_56 = arith.constant 0.797884583 : f32
    %142 = vector.broadcast %cst_56 : f32 to vector<16x256xf32>
    %143 = arith.mulf %142, %141 : vector<16x256xf32>
    %144 = math.tanh %143 : vector<16x256xf32>
    %cst_57 = arith.constant 1.000000e+00 : f32
    %145 = vector.broadcast %cst_57 : f32 to vector<16x256xf32>
    %146 = arith.addf %145, %144 : vector<16x256xf32>
    %cst_58 = arith.constant 5.000000e-01 : f32
    %147 = vector.broadcast %cst_58 : f32 to vector<16x256xf32>
    %148 = arith.mulf %147, %146 : vector<16x256xf32>
    %149 = arith.mulf %136, %148 : vector<16x256xf32>
    %150 = arith.truncf %149 : vector<16x256xf32> to vector<16x256xbf16>
    %c0_59 = arith.constant 0 : index
    %c0_60 = arith.constant 0 : index
    %c0_61 = arith.constant 0 : index
    %151 = vector.load %arg13[%c0_59, %c0_60, %c0_61] : memref<1x256x128xbf16, #tpu.memory_space<vmem>>, vector<1x256x128xbf16>
    %152 = vector.shape_cast %151 : vector<1x256x128xbf16> to vector<256x128xbf16>
    %cst_62 = arith.constant dense<0.000000e+00> : vector<16x128xf32>
    %153 = tpu.matmul %150, %152, %cst_62 {dimension_numbers = #tpu.dot_dimension_numbers<[1], [0], [0], [1], [0, 0, 1, 1], [], []>} : vector<16x256xbf16>, vector<256x128xbf16>, vector<16x128xf32> -> vector<16x128xf32>
    %c0_63 = arith.constant 0 : index
    %c0_64 = arith.constant 0 : index
    %c0_65 = arith.constant 0 : index
    %154 = vector.load %arg14[%c0_63, %c0_64, %c0_65] : memref<1x1x128xf32, #tpu.memory_space<vmem>>, vector<1x1x128xf32>
    %155 = vector.shape_cast %154 : vector<1x1x128xf32> to vector<1x128xf32>
    %156 = vector.broadcast %155 : vector<1x128xf32> to vector<16x128xf32>
    %157 = arith.addf %153, %156 : vector<16x128xf32>
    %158 = arith.addf %157, %128 : vector<16x128xf32>
    %c0_66 = arith.constant 0 : index
    %c0_67 = arith.constant 0 : index
    %c0_68 = arith.constant 0 : index
    %159 = vector.load %arg15[%c0_66, %c0_67, %c0_68] : memref<1x1x128xf32, #tpu.memory_space<vmem>>, vector<1x1x128xf32>
    %160 = vector.shape_cast %159 : vector<1x1x128xf32> to vector<1x128xf32>
    %c0_69 = arith.constant 0 : index
    %c0_70 = arith.constant 0 : index
    %c0_71 = arith.constant 0 : index
    %161 = vector.load %arg16[%c0_69, %c0_70, %c0_71] : memref<1x1x128xf32, #tpu.memory_space<vmem>>, vector<1x1x128xf32>
    %162 = vector.shape_cast %161 : vector<1x1x128xf32> to vector<1x128xf32>
    %cst_72 = arith.constant dense<0.000000e+00> : vector<16xf32>
    %163 = vector.multi_reduction <add>, %158, %cst_72 [1] : vector<16x128xf32> to vector<16xf32>
    %164 = vector.shape_cast %163 : vector<16xf32> to vector<16x1xf32>
    %cst_73 = arith.constant 1.280000e+02 : f32
    %165 = vector.broadcast %cst_73 : f32 to vector<16x1xf32>
    %166 = arith.divf %164, %165 : vector<16x1xf32>
    %167 = arith.mulf %158, %158 : vector<16x128xf32>
    %cst_74 = arith.constant dense<0.000000e+00> : vector<16xf32>
    %168 = vector.multi_reduction <add>, %167, %cst_74 [1] : vector<16x128xf32> to vector<16xf32>
    %169 = vector.shape_cast %168 : vector<16xf32> to vector<16x1xf32>
    %cst_75 = arith.constant 1.280000e+02 : f32
    %170 = vector.broadcast %cst_75 : f32 to vector<16x1xf32>
    %171 = arith.divf %169, %170 : vector<16x1xf32>
    %172 = arith.mulf %166, %166 : vector<16x1xf32>
    %173 = arith.subf %171, %172 : vector<16x1xf32>
    %174 = vector.broadcast %166 : vector<16x1xf32> to vector<16x128xf32>
    %175 = arith.subf %158, %174 : vector<16x128xf32>
    %cst_76 = arith.constant 9.99999996E-13 : f32
    %176 = vector.broadcast %cst_76 : f32 to vector<16x1xf32>
    %177 = arith.addf %173, %176 : vector<16x1xf32>
    %178 = math.rsqrt %177 : vector<16x1xf32>
    %179 = vector.broadcast %178 : vector<16x1xf32> to vector<16x128xf32>
    %180 = arith.mulf %175, %179 : vector<16x128xf32>
    %181 = vector.broadcast %160 : vector<1x128xf32> to vector<16x128xf32>
    %182 = arith.mulf %180, %181 : vector<16x128xf32>
    %183 = vector.broadcast %162 : vector<1x128xf32> to vector<16x128xf32>
    %184 = arith.addf %182, %183 : vector<16x128xf32>
    %c0_77 = arith.constant 0 : index
    %c0_78 = arith.constant 0 : index
    %185 = vector.load %arg21[%c0_77, %c0_78] : memref<16x128xf32, #tpu.memory_space<vmem>>, vector<16x128xf32>
    tpu.vector_store %arg21[%c0_77, %c0_78], %184 {strides = array<i32>} : memref<16x128xf32, #tpu.memory_space<vmem>>, vector<16x128xf32>,
    %c1_i32 = arith.constant 1 : i32
    %186 = arith.cmpi eq, %arg0, %c1_i32 : i32
    %187 = arith.extui %186 : i1 to i32
    %c0_i32_79 = arith.constant 0 : i32
    %188 = arith.cmpi ne, %187, %c0_i32_79 : i32
    scf.if %188 {
      %189 = arith.truncf %184 : vector<16x128xf32> to vector<16x128xbf16>
      %c0_80 = arith.constant 0 : index
      %c0_81 = arith.constant 0 : index
      %190 = vector.load %arg17[%c0_80, %c0_81] : memref<128x128xbf16, #tpu.memory_space<vmem>>, vector<128x128xbf16>
      %cst_82 = arith.constant dense<0.000000e+00> : vector<16x128xf32>
      %191 = tpu.matmul %189, %190, %cst_82 {dimension_numbers = #tpu.dot_dimension_numbers<[1], [0], [0], [1], [0, 0, 1, 1], [], []>} : vector<16x128xbf16>, vector<128x128xbf16>, vector<16x128xf32> -> vector<16x128xf32>
      %c0_83 = arith.constant 0 : index
      %c0_84 = arith.constant 0 : index
      %192 = vector.load %arg18[%c0_83, %c0_84] : memref<1x128xf32, #tpu.memory_space<vmem>>, vector<1x128xf32>
      %193 = vector.broadcast %192 : vector<1x128xf32> to vector<16x128xf32>
      %194 = arith.addf %191, %193 : vector<16x128xf32>
      %c0_85 = arith.constant 0 : index
      %c0_86 = arith.constant 0 : index
      %195 = vector.load %arg19[%c0_85, %c0_86] : memref<16x128xf32, #tpu.memory_space<vmem>>, vector<16x128xf32>
      tpu.vector_store %arg19[%c0_85, %c0_86], %194 {strides = array<i32>} : memref<16x128xf32, #tpu.memory_space<vmem>>, vector<16x128xf32>,
      %196 = tpu.iota {dimensions = array<i32: 1>} : vector<16x128xi32>
      %c2_i32 = arith.constant 2 : i32
      %197 = vector.broadcast %c2_i32 : i32 to vector<16x128xi32>
      %198 = arith.cmpi slt, %196, %197 : vector<16x128xi32>
      %cst_87 = arith.constant -1.000000e+30 : f32
      %199 = vector.broadcast %cst_87 : f32 to vector<16x128xf32>
      %200 = arith.select %198, %194, %199 : vector<16x128xi1>, vector<16x128xf32>
      %cst_88 = arith.constant dense<0xFF800000> : vector<16xf32>
      %201 = vector.multi_reduction <maximumf>, %200, %cst_88 [1] : vector<16x128xf32> to vector<16xf32>
      %202 = vector.shape_cast %201 : vector<16xf32> to vector<16x1xf32>
      %203 = vector.broadcast %202 : vector<16x1xf32> to vector<16x128xf32>
      %204 = arith.subf %200, %203 : vector<16x128xf32>
      %205 = math.exp %204 : vector<16x128xf32>
      %cst_89 = arith.constant dense<0.000000e+00> : vector<16xf32>
      %206 = vector.multi_reduction <add>, %205, %cst_89 [1] : vector<16x128xf32> to vector<16xf32>
      %207 = vector.shape_cast %206 : vector<16xf32> to vector<16x1xf32>
      %208 = vector.broadcast %207 : vector<16x1xf32> to vector<16x128xf32>
      %209 = arith.divf %205, %208 : vector<16x128xf32>
      %c0_90 = arith.constant 0 : index
      %c0_91 = arith.constant 0 : index
      %210 = vector.load %arg20[%c0_90, %c0_91] : memref<16x128xf32, #tpu.memory_space<vmem>>, vector<16x128xf32>
      tpu.vector_store %arg20[%c0_90, %c0_91], %209 {strides = array<i32>} : memref<16x128xf32, #tpu.memory_space<vmem>>, vector<16x128xf32>,
    } else {
    }
    return
  }
  func.func @transform_0(%arg0: i32) -> (i32, i32) {
    %c0_i32 = arith.constant 0 : i32
    %c0_i32_0 = arith.constant 0 : i32
    %c0_i32_1 = arith.constant 0 : i32
    return %c0_i32, %c0_i32_0 : i32, i32
  }
  func.func @transform_1(%arg0: i32) -> (i32, i32) {
    %c0_i32 = arith.constant 0 : i32
    %c0_i32_0 = arith.constant 0 : i32
    %c0_i32_1 = arith.constant 0 : i32
    return %c0_i32, %c0_i32_0 : i32, i32
  }
  func.func @transform_2(%arg0: i32) -> (i32, i32) {
    %c0_i32 = arith.constant 0 : i32
    %c0_i32_0 = arith.constant 0 : i32
    %c0_i32_1 = arith.constant 0 : i32
    return %c0_i32, %c0_i32_0 : i32, i32
  }
  func.func @transform_3(%arg0: i32) -> (i32, i32) {
    %c0_i32 = arith.constant 0 : i32
    %c0_i32_0 = arith.constant 0 : i32
    %c0_i32_1 = arith.constant 0 : i32
    return %c0_i32, %c0_i32_0 : i32, i32
  }
  func.func @transform_4(%arg0: i32) -> (i32, i32, i32) {
    %c0_i32 = arith.constant 0 : i32
    %c0_i32_0 = arith.constant 0 : i32
    %c0_i32_1 = arith.constant 0 : i32
    return %arg0, %c0_i32, %c0_i32_0 : i32, i32, i32
  }
  func.func @transform_5(%arg0: i32) -> (i32, i32, i32) {
    %c0_i32 = arith.constant 0 : i32
    %c0_i32_0 = arith.constant 0 : i32
    %c0_i32_1 = arith.constant 0 : i32
    return %arg0, %c0_i32, %c0_i32_0 : i32, i32, i32
  }
  func.func @transform_6(%arg0: i32) -> (i32, i32, i32) {
    %c0_i32 = arith.constant 0 : i32
    %c0_i32_0 = arith.constant 0 : i32
    %c0_i32_1 = arith.constant 0 : i32
    return %arg0, %c0_i32, %c0_i32_0 : i32, i32, i32
  }
  func.func @transform_7(%arg0: i32) -> (i32, i32, i32) {
    %c0_i32 = arith.constant 0 : i32
    %c0_i32_0 = arith.constant 0 : i32
    %c0_i32_1 = arith.constant 0 : i32
    return %arg0, %c0_i32, %c0_i32_0 : i32, i32, i32
  }
  func.func @transform_8(%arg0: i32) -> (i32, i32, i32) {
    %c0_i32 = arith.constant 0 : i32
    %c0_i32_0 = arith.constant 0 : i32
    %c0_i32_1 = arith.constant 0 : i32
    return %arg0, %c0_i32, %c0_i32_0 : i32, i32, i32
  }
  func.func @transform_9(%arg0: i32) -> (i32, i32, i32) {
    %c0_i32 = arith.constant 0 : i32
    %c0_i32_0 = arith.constant 0 : i32
    %c0_i32_1 = arith.constant 0 : i32
    return %arg0, %c0_i32, %c0_i32_0 : i32, i32, i32
  }
  func.func @transform_10(%arg0: i32) -> (i32, i32, i32) {
    %c0_i32 = arith.constant 0 : i32
    %c0_i32_0 = arith.constant 0 : i32
    %c0_i32_1 = arith.constant 0 : i32
    return %arg0, %c0_i32, %c0_i32_0 : i32, i32, i32
  }
  func.func @transform_11(%arg0: i32) -> (i32, i32, i32) {
    %c0_i32 = arith.constant 0 : i32
    %c0_i32_0 = arith.constant 0 : i32
    %c0_i32_1 = arith.constant 0 : i32
    return %arg0, %c0_i32, %c0_i32_0 : i32, i32, i32
  }
  func.func @transform_12(%arg0: i32) -> (i32, i32, i32) {
    %c0_i32 = arith.constant 0 : i32
    %c0_i32_0 = arith.constant 0 : i32
    %c0_i32_1 = arith.constant 0 : i32
    return %arg0, %c0_i32, %c0_i32_0 : i32, i32, i32
  }
  func.func @transform_13(%arg0: i32) -> (i32, i32, i32) {
    %c0_i32 = arith.constant 0 : i32
    %c0_i32_0 = arith.constant 0 : i32
    %c0_i32_1 = arith.constant 0 : i32
    return %arg0, %c0_i32, %c0_i32_0 : i32, i32, i32
  }
  func.func @transform_14(%arg0: i32) -> (i32, i32, i32) {
    %c0_i32 = arith.constant 0 : i32
    %c0_i32_0 = arith.constant 0 : i32
    %c0_i32_1 = arith.constant 0 : i32
    return %arg0, %c0_i32, %c0_i32_0 : i32, i32, i32
  }
  func.func @transform_15(%arg0: i32) -> (i32, i32, i32) {
    %c0_i32 = arith.constant 0 : i32
    %c0_i32_0 = arith.constant 0 : i32
    %c0_i32_1 = arith.constant 0 : i32
    return %arg0, %c0_i32, %c0_i32_0 : i32, i32, i32
  }
  func.func @transform_16(%arg0: i32) -> (i32, i32) {
    %c0_i32 = arith.constant 0 : i32
    %c0_i32_0 = arith.constant 0 : i32
    %c0_i32_1 = arith.constant 0 : i32
    return %c0_i32, %c0_i32_0 : i32, i32
  }
  func.func @transform_17(%arg0: i32) -> (i32, i32) {
    %c0_i32 = arith.constant 0 : i32
    %c0_i32_0 = arith.constant 0 : i32
    %c0_i32_1 = arith.constant 0 : i32
    return %c0_i32, %c0_i32_0 : i32, i32
  }
  func.func @transform_18(%arg0: i32) -> (i32, i32) {
    %c0_i32 = arith.constant 0 : i32
    %c0_i32_0 = arith.constant 0 : i32
    %c0_i32_1 = arith.constant 0 : i32
    return %c0_i32, %c0_i32_0 : i32, i32
  }
  func.func @transform_19(%arg0: i32) -> (i32, i32) {
    %c0_i32 = arith.constant 0 : i32
    %c0_i32_0 = arith.constant 0 : i32
    %c0_i32_1 = arith.constant 0 : i32
    return %c0_i32, %c0_i32_0 : i32, i32
  }
}

</mosaic_0001>

<llo_original>
// kernel: distilbert_classifier_forward.1
$region0: #{distilbert_classifier_forward.1}
  #allocation0 [shape = 'u32[]', space=smem, size = 0x4, offset = 0x4, fixed_abs, tag = 'smem constant byte address 0x4 - core index']
  #allocation1 [shape = 'u32[72,128]{1,0:T(1,128)}', space=vmem, size = 0x9000, scoped, tag = 'internal scratch']
  #allocation2 [shape = 'f32[16,128]{1,0:T(8,128)}', space=vmem, size = 0x2000, scoped, tag = 'scratch operand']
  %s0 = inlined_call_operand.vmem [shape: f32[16,128], index: 0, kind: input, shape index: {}]
  %s1 = inlined_call_operand.vmem [shape: f32[16,16], index: 1, kind: input, shape index: {}]
  %s2 = inlined_call_operand.vmem [shape: f32[1,128], index: 2, kind: input, shape index: {}]
  %s3 = inlined_call_operand.vmem [shape: f32[1,128], index: 3, kind: input, shape index: {}]
  %s4 = inlined_call_operand.hbm [shape: bf16[2,128,384], index: 4, kind: input, shape index: {}]
  %s5 = inlined_call_operand.vmem [shape: f32[2,1,384], index: 5, kind: input, shape index: {}]
  %s6 = inlined_call_operand.hbm [shape: bf16[2,128,128], index: 6, kind: input, shape index: {}]
  %s7 = inlined_call_operand.vmem [shape: f32[2,1,128], index: 7, kind: input, shape index: {}]
  %s8 = inlined_call_operand.vmem [shape: f32[2,1,128], index: 8, kind: input, shape index: {}]
  %s9 = inlined_call_operand.vmem [shape: f32[2,1,128], index: 9, kind: input, shape index: {}]
  %s10 = inlined_call_operand.vmem [shape: bf16[2,128,256], index: 10, kind: input, shape index: {}]
  %s11 = inlined_call_operand.vmem [shape: f32[2,1,256], index: 11, kind: input, shape index: {}]
  %s12 = inlined_call_operand.hbm [shape: bf16[2,256,128], index: 12, kind: input, shape index: {}]
  %s13 = inlined_call_operand.vmem [shape: f32[2,1,128], index: 13, kind: input, shape index: {}]
  %s14 = inlined_call_operand.vmem [shape: f32[2,1,128], index: 14, kind: input, shape index: {}]
  %s15 = inlined_call_operand.vmem [shape: f32[2,1,128], index: 15, kind: input, shape index: {}]
  %s16 = inlined_call_operand.hbm [shape: bf16[128,128], index: 16, kind: input, shape index: {}]
  %s17 = inlined_call_operand.vmem [shape: f32[1,128], index: 17, kind: input, shape index: {}]
  %s18 = inlined_call_operand.vmem [shape: f32[16,128], index: 18, kind: output, shape index: {0}]
  %s19 = inlined_call_operand.vmem [shape: f32[16,128], index: 19, kind: output, shape index: {1}]
  %20 = xla_tuple %s18, %s19
  %s21 = sld [smem:[#allocation0]]
  $region137: #{distilbert_classifier_forward.1} parent=0
    _
  %s23 = ssub.s32 1, %s21
  %s24 = scalar_select 0, %s23, %s21
  $region1: #{distilbert_classifier_forward.1} parent=0
    #allocation3 [shape = 'u8[196608]{0}', space=vmem, size = 0x30000, scoped, tag = 'input window, operand 4']
    #allocation4 [shape = 's32[2]{0}', space=sflag, size = 0x8, scoped, tag = 'scoped memory for distilbert_classifier_forward.1']
    #allocation5 [shape = 'u8[65536]{0}', space=vmem, size = 0x10000, scoped, tag = 'input window, operand 6']
    #allocation6 [shape = 's32[2]{0}', space=sflag, size = 0x8, scoped, tag = 'scoped memory for distilbert_classifier_forward.1']
    #allocation7 [shape = 'u8[131072]{0}', space=vmem, size = 0x20000, scoped, tag = 'input window, operand 12']
    #allocation8 [shape = 'u8[32768]{0}', space=vmem, size = 0x8000, scoped, tag = 'input window, operand 16, single buffered']
    #allocation9 [shape = 's32[1]{0}', space=sflag, size = 0x4, scoped, tag = 'scoped memory for distilbert_classifier_forward.1']
    %25 = vsyncpa [#allocation4], 0
    %s26 = scalar_lea.sflag [#allocation4], 1
    %27 = vsyncpa %s26, 0
    %28 = vsyncpa [#allocation6], 0
    %s29 = scalar_lea.sflag [#allocation6], 1
    %30 = vsyncpa %s29, 0
    %31 = vsyncpa [#allocation9], 0
    loop: start=0, step=1, limit=4
    $region2: #{distilbert_classifier_forward.1} parent=1 // loop_pre_header
      _
    $region3: #{distilbert_classifier_forward.1} parent=1 // loop_header
      %s33 = sphi 0, %s37
      %p34 = scmp.ge.s32.totalorder %s33, 4
      %s41 = sphi 0, %s41
      %s43 = sphi 0, %s41
      %s44 = sphi 0, %s43
      %s58 = sphi 0, %s44
      %s62 = sphi 0, %s62
      %s64 = sphi 0, %s62
      %s65 = sphi 0, %s64
      %s79 = sphi 0, %s65
      %s83 = sphi 0, %s83
      %s85 = sphi 0, %s83
      %s86 = sphi 0, %s85
      %s100 = sphi 0, %s86
      %s104 = sphi 0, %s104
      %s106 = sphi 0, %s104
      %s107 = sphi 0, %s106
      %s121 = sphi 0, %s107
      %s127 = sphi 0, %s129
      %s130 = sphi 0, %s127
      %s131 = sphi 0, %s130
      %s147 = sphi 0, %s131
      %s153 = sphi 0, %s155
      %s156 = sphi 0, %s153
      %s157 = sphi 0, %s156
      %s173 = sphi 0, %s157
      %s179 = sphi 0, %s181
      %s182 = sphi 0, %s179
      %s183 = sphi 0, %s182
      %s199 = sphi 0, %s183
      %s205 = sphi 0, %s207
      %s208 = sphi 0, %s205
      %s209 = sphi 0, %s208
      %s225 = sphi 0, %s209
      %s231 = sphi 0, %s233
      %s234 = sphi 0, %s231
      %s235 = sphi 0, %s234
      %s251 = sphi 0, %s235
      %s257 = sphi 0, %s259
      %s260 = sphi 0, %s257
      %s261 = sphi 0, %s260
      %s277 = sphi 0, %s261
      %s283 = sphi 0, %s285
      %s286 = sphi 0, %s283
      %s287 = sphi 0, %s286
      %s303 = sphi 0, %s287
      %s309 = sphi 0, %s311
      %s312 = sphi 0, %s309
      %s313 = sphi 0, %s312
      %s329 = sphi 0, %s313
      %s335 = sphi 0, %s337
      %s338 = sphi 0, %s335
      %s339 = sphi 0, %s338
      %s355 = sphi 0, %s339
      %s361 = sphi 0, %s363
      %s364 = sphi 0, %s361
      %s365 = sphi 0, %s364
      %s381 = sphi 0, %s365
      %s387 = sphi 0, %s389
      %s390 = sphi 0, %s387
      %s391 = sphi 0, %s390
      %s407 = sphi 0, %s391
      %s413 = sphi 0, %s415
      %s416 = sphi 0, %s413
      %s417 = sphi 0, %s416
      %s433 = sphi 0, %s417
      %s437 = sphi 0, %s437
      %s439 = sphi 0, %s437
      %s440 = sphi 0, %s439
      %s454 = sphi 0, %s440
      %s458 = sphi 0, %s458
      %s460 = sphi 0, %s458
      %s461 = sphi 0, %s460
      %s475 = sphi 0, %s461
      %s479 = sphi 0, %s479
      %s481 = sphi 0, %s479
      %s482 = sphi 0, %s481
      %s496 = sphi 0, %s482
      %s500 = sphi 0, %s500
      %s502 = sphi 0, %s500
      %s503 = sphi 0, %s502
      %s517 = sphi 0, %s503
    $region4: #{distilbert_classifier_forward.1} parent=1 // loop_header_branch
      %36 = sbr.rel (%p34) target = $region8
    $region5: #{distilbert_classifier_forward.1} parent=1 // loop_body
      %s38 = ssub.s32 %s33, 1
      %s39 = ssub.s32 %s33, 2
      %s40 = sadd.s32 %s33, 1
      %s42 = sadd.s32 %s41, 1
      %p45 = scmp.eq.s32.totalorder %s33, 1
      %p46 = scmp.ne.s32.totalorder %s41, %s43
      %p47 = scmp.eq.s32.totalorder %s33, 0
      %p48 = por %p46, %p47
      %p49 = scmp.ne.s32.totalorder %s41, %s43
      %p50 = scmp.eq.s32.totalorder %s38, 1
      %p51 = por %p49, %p50
      %p52 = scmp.ne.s32.totalorder %s43, %s44
      %p53 = scmp.eq.s32.totalorder %s38, 0
      %p54 = por %p52, %p53
      %p55 = scmp.ne.s32.totalorder %s43, %s44
      %p56 = scmp.eq.s32.totalorder %s39, 1
      %p57 = por %p55, %p56
      %p59 = scmp.ne.s32.totalorder %s44, %s58
      %p60 = scmp.eq.s32.totalorder %s39, 0
      %p61 = por %p59, %p60
      %s63 = sadd.s32 %s62, 1
      %p66 = scmp.eq.s32.totalorder %s33, 1
      %p67 = scmp.ne.s32.totalorder %s62, %s64
      %p68 = scmp.eq.s32.totalorder %s33, 0
      %p69 = por %p67, %p68
      %p70 = scmp.ne.s32.totalorder %s62, %s64
      %p71 = scmp.eq.s32.totalorder %s38, 1
      %p72 = por %p70, %p71
      %p73 = scmp.ne.s32.totalorder %s64, %s65
      %p74 = scmp.eq.s32.totalorder %s38, 0
      %p75 = por %p73, %p74
      %p76 = scmp.ne.s32.totalorder %s64, %s65
      %p77 = scmp.eq.s32.totalorder %s39, 1
      %p78 = por %p76, %p77
      %p80 = scmp.ne.s32.totalorder %s65, %s79
      %p81 = scmp.eq.s32.totalorder %s39, 0
      %p82 = por %p80, %p81
      %s84 = sadd.s32 %s83, 1
      %p87 = scmp.eq.s32.totalorder %s33, 1
      %p88 = scmp.ne.s32.totalorder %s83, %s85
      %p89 = scmp.eq.s32.totalorder %s33, 0
      %p90 = por %p88, %p89
      %p91 = scmp.ne.s32.totalorder %s83, %s85
      %p92 = scmp.eq.s32.totalorder %s38, 1
      %p93 = por %p91, %p92
      %p94 = scmp.ne.s32.totalorder %s85, %s86
      %p95 = scmp.eq.s32.totalorder %s38, 0
      %p96 = por %p94, %p95
      %p97 = scmp.ne.s32.totalorder %s85, %s86
      %p98 = scmp.eq.s32.totalorder %s39, 1
      %p99 = por %p97, %p98
      %p101 = scmp.ne.s32.totalorder %s86, %s100
      %p102 = scmp.eq.s32.totalorder %s39, 0
      %p103 = por %p101, %p102
      %s105 = sadd.s32 %s104, 1
      %p108 = scmp.eq.s32.totalorder %s33, 1
      %p109 = scmp.ne.s32.totalorder %s104, %s106
      %p110 = scmp.eq.s32.totalorder %s33, 0
      %p111 = por %p109, %p110
      %p112 = scmp.ne.s32.totalorder %s104, %s106
      %p113 = scmp.eq.s32.totalorder %s38, 1
      %p114 = por %p112, %p113
      %p115 = scmp.ne.s32.totalorder %s106, %s107
      %p116 = scmp.eq.s32.totalorder %s38, 0
      %p117 = por %p115, %p116
      %p118 = scmp.ne.s32.totalorder %s106, %s107
      %p119 = scmp.eq.s32.totalorder %s39, 1
      %p120 = por %p118, %p119
      %p122 = scmp.ne.s32.totalorder %s107, %s121
      %p123 = scmp.eq.s32.totalorder %s39, 0
      %p124 = por %p122, %p123
      %s125 = ssub.s32 %s33, %s40
      %p126 = scmp.eq.s32.totalorder %s125, 0
      %s128 = sadd.s32 %s127, 1
      %s129 = scalar_select %p126, %s127, %s128
      %p132 = pneg %p126
      %p133 = scmp.eq.s32.totalorder %s33, 1
      %p134 = por %p132, %p133
      %p135 = scmp.ne.s32.totalorder %s127, %s130
      %p136 = scmp.eq.s32.totalorder %s33, 0
      %p137 = por %p135, %p136
      %p138 = scmp.ne.s32.totalorder %s127, %s130
      %p139 = scmp.eq.s32.totalorder %s38, 1
      %p140 = por %p138, %p139
      %p141 = scmp.ne.s32.totalorder %s130, %s131
      %p142 = scmp.eq.s32.totalorder %s38, 0
      %p143 = por %p141, %p142
      %p144 = scmp.ne.s32.totalorder %s130, %s131
      %p145 = scmp.eq.s32.totalorder %s39, 1
      %p146 = por %p144, %p145
      %p148 = scmp.ne.s32.totalorder %s131, %s147
      %p149 = scmp.eq.s32.totalorder %s39, 0
      %p150 = por %p148, %p149
      %s151 = ssub.s32 %s33, %s40
      %p152 = scmp.eq.s32.totalorder %s151, 0
      %s154 = sadd.s32 %s153, 1
      %s155 = scalar_select %p152, %s153, %s154
      %p158 = pneg %p152
      %p159 = scmp.eq.s32.totalorder %s33, 1
      %p160 = por %p158, %p159
      %p161 = scmp.ne.s32.totalorder %s153, %s156
      %p162 = scmp.eq.s32.totalorder %s33, 0
      %p163 = por %p161, %p162
      %p164 = scmp.ne.s32.totalorder %s153, %s156
      %p165 = scmp.eq.s32.totalorder %s38, 1
      %p166 = por %p164, %p165
      %p167 = scmp.ne.s32.totalorder %s156, %s157
      %p168 = scmp.eq.s32.totalorder %s38, 0
      %p169 = por %p167, %p168
      %p170 = scmp.ne.s32.totalorder %s156, %s157
      %p171 = scmp.eq.s32.totalorder %s39, 1
      %p172 = por %p170, %p171
      %p174 = scmp.ne.s32.totalorder %s157, %s173
      %p175 = scmp.eq.s32.totalorder %s39, 0
      %p176 = por %p174, %p175
      %s177 = ssub.s32 %s33, %s40
      %p178 = scmp.eq.s32.totalorder %s177, 0
      %s180 = sadd.s32 %s179, 1
      %s181 = scalar_select %p178, %s179, %s180
      %p184 = pneg %p178
      %p185 = scmp.eq.s32.totalorder %s33, 1
      %p186 = por %p184, %p185
      %p187 = scmp.ne.s32.totalorder %s179, %s182
      %p188 = scmp.eq.s32.totalorder %s33, 0
      %p189 = por %p187, %p188
      %p190 = scmp.ne.s32.totalorder %s179, %s182
      %p191 = scmp.eq.s32.totalorder %s38, 1
      %p192 = por %p190, %p191
      %p193 = scmp.ne.s32.totalorder %s182, %s183
      %p194 = scmp.eq.s32.totalorder %s38, 0
      %p195 = por %p193, %p194
      %p196 = scmp.ne.s32.totalorder %s182, %s183
      %p197 = scmp.eq.s32.totalorder %s39, 1
      %p198 = por %p196, %p197
      %p200 = scmp.ne.s32.totalorder %s183, %s199
      %p201 = scmp.eq.s32.totalorder %s39, 0
      %p202 = por %p200, %p201
      %s203 = ssub.s32 %s33, %s40
      %p204 = scmp.eq.s32.totalorder %s203, 0
      %s206 = sadd.s32 %s205, 1
      %s207 = scalar_select %p204, %s205, %s206
      %p210 = pneg %p204
      %p211 = scmp.eq.s32.totalorder %s33, 1
      %p212 = por %p210, %p211
      %p213 = scmp.ne.s32.totalorder %s205, %s208
      %p214 = scmp.eq.s32.totalorder %s33, 0
      %p215 = por %p213, %p214
      %p216 = scmp.ne.s32.totalorder %s205, %s208
      %p217 = scmp.eq.s32.totalorder %s38, 1
      %p218 = por %p216, %p217
      %p219 = scmp.ne.s32.totalorder %s208, %s209
      %p220 = scmp.eq.s32.totalorder %s38, 0
      %p221 = por %p219, %p220
      %p222 = scmp.ne.s32.totalorder %s208, %s209
      %p223 = scmp.eq.s32.totalorder %s39, 1
      %p224 = por %p222, %p223
      %p226 = scmp.ne.s32.totalorder %s209, %s225
      %p227 = scmp.eq.s32.totalorder %s39, 0
      %p228 = por %p226, %p227
      %s229 = ssub.s32 %s33, %s40
      %p230 = scmp.eq.s32.totalorder %s229, 0
      %s232 = sadd.s32 %s231, 1
      %s233 = scalar_select %p230, %s231, %s232
      %p236 = pneg %p230
      %p237 = scmp.eq.s32.totalorder %s33, 1
      %p238 = por %p236, %p237
      %p239 = scmp.ne.s32.totalorder %s231, %s234
      %p240 = scmp.eq.s32.totalorder %s33, 0
      %p241 = por %p239, %p240
      %p242 = scmp.ne.s32.totalorder %s231, %s234
      %p243 = scmp.eq.s32.totalorder %s38, 1
      %p244 = por %p242, %p243
      %p245 = scmp.ne.s32.totalorder %s234, %s235
      %p246 = scmp.eq.s32.totalorder %s38, 0
      %p247 = por %p245, %p246
      %p248 = scmp.ne.s32.totalorder %s234, %s235
      %p249 = scmp.eq.s32.totalorder %s39, 1
      %p250 = por %p248, %p249
      %p252 = scmp.ne.s32.totalorder %s235, %s251
      %p253 = scmp.eq.s32.totalorder %s39, 0
      %p254 = por %p252, %p253
      %s255 = ssub.s32 %s33, %s40
      %p256 = scmp.eq.s32.totalorder %s255, 0
      %s258 = sadd.s32 %s257, 1
      %s259 = scalar_select %p256, %s257, %s258
      %p262 = pneg %p256
      %p263 = scmp.eq.s32.totalorder %s33, 1
      %p264 = por %p262, %p263
      %p265 = scmp.ne.s32.totalorder %s257, %s260
      %p266 = scmp.eq.s32.totalorder %s33, 0
      %p267 = por %p265, %p266
      %p268 = scmp.ne.s32.totalorder %s257, %s260
      %p269 = scmp.eq.s32.totalorder %s38, 1
      %p270 = por %p268, %p269
      %p271 = scmp.ne.s32.totalorder %s260, %s261
      %p272 = scmp.eq.s32.totalorder %s38, 0
      %p273 = por %p271, %p272
      %p274 = scmp.ne.s32.totalorder %s260, %s261
      %p275 = scmp.eq.s32.totalorder %s39, 1
      %p276 = por %p274, %p275
      %p278 = scmp.ne.s32.totalorder %s261, %s277
      %p279 = scmp.eq.s32.totalorder %s39, 0
      %p280 = por %p278, %p279
      %s281 = ssub.s32 %s33, %s40
      %p282 = scmp.eq.s32.totalorder %s281, 0
      %s284 = sadd.s32 %s283, 1
      %s285 = scalar_select %p282, %s283, %s284
      %p288 = pneg %p282
      %p289 = scmp.eq.s32.totalorder %s33, 1
      %p290 = por %p288, %p289
      %p291 = scmp.ne.s32.totalorder %s283, %s286
      %p292 = scmp.eq.s32.totalorder %s33, 0
      %p293 = por %p291, %p292
      %p294 = scmp.ne.s32.totalorder %s283, %s286
      %p295 = scmp.eq.s32.totalorder %s38, 1
      %p296 = por %p294, %p295
      %p297 = scmp.ne.s32.totalorder %s286, %s287
      %p298 = scmp.eq.s32.totalorder %s38, 0
      %p299 = por %p297, %p298
      %p300 = scmp.ne.s32.totalorder %s286, %s287
      %p301 = scmp.eq.s32.totalorder %s39, 1
      %p302 = por %p300, %p301
      %p304 = scmp.ne.s32.totalorder %s287, %s303
      %p305 = scmp.eq.s32.totalorder %s39, 0
      %p306 = por %p304, %p305
      %s307 = ssub.s32 %s33, %s40
      %p308 = scmp.eq.s32.totalorder %s307, 0
      %s310 = sadd.s32 %s309, 1
      %s311 = scalar_select %p308, %s309, %s310
      %p314 = pneg %p308
      %p315 = scmp.eq.s32.totalorder %s33, 1
      %p316 = por %p314, %p315
      %p317 = scmp.ne.s32.totalorder %s309, %s312
      %p318 = scmp.eq.s32.totalorder %s33, 0
      %p319 = por %p317, %p318
      %p320 = scmp.ne.s32.totalorder %s309, %s312
      %p321 = scmp.eq.s32.totalorder %s38, 1
      %p322 = por %p320, %p321
      %p323 = scmp.ne.s32.totalorder %s312, %s313
      %p324 = scmp.eq.s32.totalorder %s38, 0
      %p325 = por %p323, %p324
      %p326 = scmp.ne.s32.totalorder %s312, %s313
      %p327 = scmp.eq.s32.totalorder %s39, 1
      %p328 = por %p326, %p327
      %p330 = scmp.ne.s32.totalorder %s313, %s329
      %p331 = scmp.eq.s32.totalorder %s39, 0
      %p332 = por %p330, %p331
      %s333 = ssub.s32 %s33, %s40
      %p334 = scmp.eq.s32.totalorder %s333, 0
      %s336 = sadd.s32 %s335, 1
      %s337 = scalar_select %p334, %s335, %s336
      %p340 = pneg %p334
      %p341 = scmp.eq.s32.totalorder %s33, 1
      %p342 = por %p340, %p341
      %p343 = scmp.ne.s32.totalorder %s335, %s338
      %p344 = scmp.eq.s32.totalorder %s33, 0
      %p345 = por %p343, %p344
      %p346 = scmp.ne.s32.totalorder %s335, %s338
      %p347 = scmp.eq.s32.totalorder %s38, 1
      %p348 = por %p346, %p347
      %p349 = scmp.ne.s32.totalorder %s338, %s339
      %p350 = scmp.eq.s32.totalorder %s38, 0
      %p351 = por %p349, %p350
      %p352 = scmp.ne.s32.totalorder %s338, %s339
      %p353 = scmp.eq.s32.totalorder %s39, 1
      %p354 = por %p352, %p353
      %p356 = scmp.ne.s32.totalorder %s339, %s355
      %p357 = scmp.eq.s32.totalorder %s39, 0
      %p358 = por %p356, %p357
      %s359 = ssub.s32 %s33, %s40
      %p360 = scmp.eq.s32.totalorder %s359, 0
      %s362 = sadd.s32 %s361, 1
      %s363 = scalar_select %p360, %s361, %s362
      %p366 = pneg %p360
      %p367 = scmp.eq.s32.totalorder %s33, 1
      %p368 = por %p366, %p367
      %p369 = scmp.ne.s32.totalorder %s361, %s364
      %p370 = scmp.eq.s32.totalorder %s33, 0
      %p371 = por %p369, %p370
      %p372 = scmp.ne.s32.totalorder %s361, %s364
      %p373 = scmp.eq.s32.totalorder %s38, 1
      %p374 = por %p372, %p373
      %p375 = scmp.ne.s32.totalorder %s364, %s365
      %p376 = scmp.eq.s32.totalorder %s38, 0
      %p377 = por %p375, %p376
      %p378 = scmp.ne.s32.totalorder %s364, %s365
      %p379 = scmp.eq.s32.totalorder %s39, 1
      %p380 = por %p378, %p379
      %p382 = scmp.ne.s32.totalorder %s365, %s381
      %p383 = scmp.eq.s32.totalorder %s39, 0
      %p384 = por %p382, %p383
      %s385 = ssub.s32 %s33, %s40
      %p386 = scmp.eq.s32.totalorder %s385, 0
      %s388 = sadd.s32 %s387, 1
      %s389 = scalar_select %p386, %s387, %s388
      %p392 = pneg %p386
      %p393 = scmp.eq.s32.totalorder %s33, 1
      %p394 = por %p392, %p393
      %p395 = scmp.ne.s32.totalorder %s387, %s390
      %p396 = scmp.eq.s32.totalorder %s33, 0
      %p397 = por %p395, %p396
      %p398 = scmp.ne.s32.totalorder %s387, %s390
      %p399 = scmp.eq.s32.totalorder %s38, 1
      %p400 = por %p398, %p399
      %p401 = scmp.ne.s32.totalorder %s390, %s391
      %p402 = scmp.eq.s32.totalorder %s38, 0
      %p403 = por %p401, %p402
      %p404 = scmp.ne.s32.totalorder %s390, %s391
      %p405 = scmp.eq.s32.totalorder %s39, 1
      %p406 = por %p404, %p405
      %p408 = scmp.ne.s32.totalorder %s391, %s407
      %p409 = scmp.eq.s32.totalorder %s39, 0
      %p410 = por %p408, %p409
      %s411 = ssub.s32 %s33, %s40
      %p412 = scmp.eq.s32.totalorder %s411, 0
      %s414 = sadd.s32 %s413, 1
      %s415 = scalar_select %p412, %s413, %s414
      %p418 = pneg %p412
      %p419 = scmp.eq.s32.totalorder %s33, 1
      %p420 = por %p418, %p419
      %p421 = scmp.ne.s32.totalorder %s413, %s416
      %p422 = scmp.eq.s32.totalorder %s33, 0
      %p423 = por %p421, %p422
      %p424 = scmp.ne.s32.totalorder %s413, %s416
      %p425 = scmp.eq.s32.totalorder %s38, 1
      %p426 = por %p424, %p425
      %p427 = scmp.ne.s32.totalorder %s416, %s417
      %p428 = scmp.eq.s32.totalorder %s38, 0
      %p429 = por %p427, %p428
      %p430 = scmp.ne.s32.totalorder %s416, %s417
      %p431 = scmp.eq.s32.totalorder %s39, 1
      %p432 = por %p430, %p431
      %p434 = scmp.ne.s32.totalorder %s417, %s433
      %p435 = scmp.eq.s32.totalorder %s39, 0
      %p436 = por %p434, %p435
      %s438 = sadd.s32 %s437, 1
      %p441 = scmp.eq.s32.totalorder %s33, 1
      %p442 = scmp.ne.s32.totalorder %s437, %s439
      %p443 = scmp.eq.s32.totalorder %s33, 0
      %p444 = por %p442, %p443
      %p445 = scmp.ne.s32.totalorder %s437, %s439
      %p446 = scmp.eq.s32.totalorder %s38, 1
      %p447 = por %p445, %p446
      %p448 = scmp.ne.s32.totalorder %s439, %s440
      %p449 = scmp.eq.s32.totalorder %s38, 0
      %p450 = por %p448, %p449
      %p451 = scmp.ne.s32.totalorder %s439, %s440
      %p452 = scmp.eq.s32.totalorder %s39, 1
      %p453 = por %p451, %p452
      %p455 = scmp.ne.s32.totalorder %s440, %s454
      %p456 = scmp.eq.s32.totalorder %s39, 0
      %p457 = por %p455, %p456
      %s459 = sadd.s32 %s458, 1
      %p462 = scmp.eq.s32.totalorder %s33, 1
      %p463 = scmp.ne.s32.totalorder %s458, %s460
      %p464 = scmp.eq.s32.totalorder %s33, 0
      %p465 = por %p463, %p464
      %p466 = scmp.ne.s32.totalorder %s458, %s460
      %p467 = scmp.eq.s32.totalorder %s38, 1
      %p468 = por %p466, %p467
      %p469 = scmp.ne.s32.totalorder %s460, %s461
      %p470 = scmp.eq.s32.totalorder %s38, 0
      %p471 = por %p469, %p470
      %p472 = scmp.ne.s32.totalorder %s460, %s461
      %p473 = scmp.eq.s32.totalorder %s39, 1
      %p474 = por %p472, %p473
      %p476 = scmp.ne.s32.totalorder %s461, %s475
      %p477 = scmp.eq.s32.totalorder %s39, 0
      %p478 = por %p476, %p477
      %s480 = sadd.s32 %s479, 1
      %p483 = scmp.eq.s32.totalorder %s33, 1
      %p484 = scmp.ne.s32.totalorder %s479, %s481
      %p485 = scmp.eq.s32.totalorder %s33, 0
      %p486 = por %p484, %p485
      %p487 = scmp.ne.s32.totalorder %s479, %s481
      %p488 = scmp.eq.s32.totalorder %s38, 1
      %p489 = por %p487, %p488
      %p490 = scmp.ne.s32.totalorder %s481, %s482
      %p491 = scmp.eq.s32.totalorder %s38, 0
      %p492 = por %p490, %p491
      %p493 = scmp.ne.s32.totalorder %s481, %s482
      %p494 = scmp.eq.s32.totalorder %s39, 1
      %p495 = por %p493, %p494
      %p497 = scmp.ne.s32.totalorder %s482, %s496
      %p498 = scmp.eq.s32.totalorder %s39, 0
      %p499 = por %p497, %p498
      %s501 = sadd.s32 %s500, 1
      %p504 = scmp.eq.s32.totalorder %s33, 1
      %p505 = scmp.ne.s32.totalorder %s500, %s502
      %p506 = scmp.eq.s32.totalorder %s33, 0
      %p507 = por %p505, %p506
      %p508 = scmp.ne.s32.totalorder %s500, %s502
      %p509 = scmp.eq.s32.totalorder %s38, 1
      %p510 = por %p508, %p509
      %p511 = scmp.ne.s32.totalorder %s502, %s503
      %p512 = scmp.eq.s32.totalorder %s38, 0
      %p513 = por %p511, %p512
      %p514 = scmp.ne.s32.totalorder %s502, %s503
      %p515 = scmp.eq.s32.totalorder %s39, 1
      %p516 = por %p514, %p515
      %p518 = scmp.ne.s32.totalorder %s503, %s517
      %p519 = scmp.eq.s32.totalorder %s39, 0
      %p520 = por %p518, %p519
      %p521 = scmp.le.s32.totalorder 1, %s33
      %p522 = scmp.lt.s32.totalorder %s33, 3
      %p523 = pnand %p521, %p522
      %p524 = pneg %p523
      // Predicated region
      $region9: #{distilbert_classifier_forward.1} parent=5 // pred_check
        _
      $region10: #{distilbert_classifier_forward.1} parent=5 // pred_check_branch
        %526 = sbr.rel (%p523) target = $region12
      $region11: #{distilbert_classifier_forward.1} parent=5 // pred_region
        %s527 = ssub.s32 %s33, 1
        // Predicated region
        $region13: #{distilbert_classifier_forward.1} parent=11 // pred_check
          %p528 = pneg %p54
        $region14: #{distilbert_classifier_forward.1} parent=11 // pred_check_branch
          %530 = sbr.rel (%p528) target = $region16
        $region15: #{distilbert_classifier_forward.1} parent=11 // pred_region
          _
        $region16: #{distilbert_classifier_forward.1} parent=11 // pred_fallthru
          _
        // Predicated region
        $region17: #{distilbert_classifier_forward.1} parent=11 // pred_check
          %p531 = pneg %p75
        $region18: #{distilbert_classifier_forward.1} parent=11 // pred_check_branch
          %533 = sbr.rel (%p531) target = $region20
        $region19: #{distilbert_classifier_forward.1} parent=11 // pred_region
          _
        $region20: #{distilbert_classifier_forward.1} parent=11 // pred_fallthru
          _
        // Predicated region
        $region21: #{distilbert_classifier_forward.1} parent=11 // pred_check
          %p534 = pneg %p96
        $region22: #{distilbert_classifier_forward.1} parent=11 // pred_check_branch
          %536 = sbr.rel (%p534) target = $region24
        $region23: #{distilbert_classifier_forward.1} parent=11 // pred_region
          _
        $region24: #{distilbert_classifier_forward.1} parent=11 // pred_fallthru
          _
        // Predicated region
        $region25: #{distilbert_classifier_forward.1} parent=11 // pred_check
          %p537 = pneg %p117
        $region26: #{distilbert_classifier_forward.1} parent=11 // pred_check_branch
          %539 = sbr.rel (%p537) target = $region28
        $region27: #{distilbert_classifier_forward.1} parent=11 // pred_region
          _
        $region28: #{distilbert_classifier_forward.1} parent=11 // pred_fallthru
          _
        // Predicated region
        $region29: #{distilbert_classifier_forward.1} parent=11 // pred_check
          %p540 = pneg %p450
        $region30: #{distilbert_classifier_forward.1} parent=11 // pred_check_branch
          %542 = sbr.rel (%p540) target = $region32
        $region31: #{distilbert_classifier_forward.1} parent=11 // pred_region
          %544 = vsyncadd [#allocation9], 0
          %s545 = sshll.u32 %s16, 4
          %s546 = int_to_ptr.hbm [resolvable:$true] %s545
          %s547 = sshll.u32 [#allocation8], 4
          %s548 = int_to_ptr.vmem [resolvable:$true] %s547
          %553 = dma.hbm_to_vmem [thread:$0]  %s546, 1024, %s548, [#allocation9], 64, 64, 4
        $region32: #{distilbert_classifier_forward.1} parent=11 // pred_fallthru
          _
        // Predicated region
        $region33: #{distilbert_classifier_forward.1} parent=11 // pred_check
          %p554 = pneg %p471
        $region34: #{distilbert_classifier_forward.1} parent=11 // pred_check_branch
          %556 = sbr.rel (%p554) target = $region36
        $region35: #{distilbert_classifier_forward.1} parent=11 // pred_region
          _
        $region36: #{distilbert_classifier_forward.1} parent=11 // pred_fallthru
          _
      $region12: #{distilbert_classifier_forward.1} parent=5 // pred_fallthru
        _
      %p557 = scmp.lt.s32.totalorder %s33, 2
      // Predicated region
      $region37: #{distilbert_classifier_forward.1} parent=5 // pred_check
        %p558 = pneg %p557
      $region38: #{distilbert_classifier_forward.1} parent=5 // pred_check_branch
        %560 = sbr.rel (%p558) target = $region40
      $region39: #{distilbert_classifier_forward.1} parent=5 // pred_region
        // Predicated region
        $region41: #{distilbert_classifier_forward.1} parent=39 // pred_check
          %p561 = pneg %p137
        $region42: #{distilbert_classifier_forward.1} parent=39 // pred_check_branch
          %563 = sbr.rel (%p561) target = $region44
        $region43: #{distilbert_classifier_forward.1} parent=39 // pred_region
          %s564 = sand.u32 %s127, 1
          %s565 = scalar_lea.sflag [#allocation4], %s564
          %s566 = sand.u32 %s127, 1
          %s567 = smul.addr %s566, 192
          %s568 = scalar_lea.vmem [#allocation3], %s567
          %570 = vsyncadd %s565, 0
          %s571 = smul.addr %s33, 48
          %s572 = smul.addr %s571, 4
          %s573 = scalar_lea.hbm %s4, %s572
          %s574 = sshll.u32 %s573, 4
          %s575 = int_to_ptr.hbm [resolvable:$true] %s574
          %s576 = sshll.u32 %s568, 4
          %s577 = int_to_ptr.vmem [resolvable:$true] %s576
          %582 = dma.hbm_to_vmem [thread:$0]  %s575, 3072, %s577, %s565, 192, 192, 12
        $region44: #{distilbert_classifier_forward.1} parent=39 // pred_fallthru
          _
        // Predicated region
        $region45: #{distilbert_classifier_forward.1} parent=39 // pred_check
          %p583 = pneg %p163
        $region46: #{distilbert_classifier_forward.1} parent=39 // pred_check_branch
          %585 = sbr.rel (%p583) target = $region48
        $region47: #{distilbert_classifier_forward.1} parent=39 // pred_region
          %p586 = scmp.lt.s32.totalorder %s33, 1
          %s587 = scalar_select %p586, %s33, 1
          %s588 = smul.addr %s587, 3
          %s589 = scalar_lea.vmem %s5, %s588
        $region48: #{distilbert_classifier_forward.1} parent=39 // pred_fallthru
          _
        // Predicated region
        $region49: #{distilbert_classifier_forward.1} parent=39 // pred_check
          %p590 = pneg %p189
        $region50: #{distilbert_classifier_forward.1} parent=39 // pred_check_branch
          %592 = sbr.rel (%p590) target = $region52
        $region51: #{distilbert_classifier_forward.1} parent=39 // pred_region
          %s593 = sand.u32 %s33, 1
          %s594 = scalar_lea.sflag [#allocation6], %s593
          %s595 = sand.u32 %s179, 1
          %s596 = smul.addr %s595, 64
          %s597 = scalar_lea.vmem [#allocation5], %s596
          %599 = vsyncadd %s594, 0
          %s600 = smul.addr %s33, 16
          %s601 = smul.addr %s600, 4
          %s602 = scalar_lea.hbm %s6, %s601
          %s603 = sshll.u32 %s602, 4
          %s604 = int_to_ptr.hbm [resolvable:$true] %s603
          %s605 = sshll.u32 %s597, 4
          %s606 = int_to_ptr.vmem [resolvable:$true] %s605
          %611 = dma.hbm_to_vmem [thread:$0]  %s604, 1024, %s606, %s594, 64, 64, 4
        $region52: #{distilbert_classifier_forward.1} parent=39 // pred_fallthru
          _
        // Predicated region
        $region53: #{distilbert_classifier_forward.1} parent=39 // pred_check
          %p612 = pneg %p215
        $region54: #{distilbert_classifier_forward.1} parent=39 // pred_check_branch
          %614 = sbr.rel (%p612) target = $region56
        $region55: #{distilbert_classifier_forward.1} parent=39 // pred_region
          %p615 = scmp.lt.s32.totalorder %s33, 1
          %s616 = scalar_select %p615, %s33, 1
          %s617 = scalar_lea.vmem %s7, %s616
        $region56: #{distilbert_classifier_forward.1} parent=39 // pred_fallthru
          _
        // Predicated region
        $region57: #{distilbert_classifier_forward.1} parent=39 // pred_check
          %p618 = pneg %p241
        $region58: #{distilbert_classifier_forward.1} parent=39 // pred_check_branch
          %620 = sbr.rel (%p618) target = $region60
        $region59: #{distilbert_classifier_forward.1} parent=39 // pred_region
          %p621 = scmp.lt.s32.totalorder %s33, 1
          %s622 = scalar_select %p621, %s33, 1
          %s623 = scalar_lea.vmem %s8, %s622
        $region60: #{distilbert_classifier_forward.1} parent=39 // pred_fallthru
          _
        // Predicated region
        $region61: #{distilbert_classifier_forward.1} parent=39 // pred_check
          %p624 = pneg %p267
        $region62: #{distilbert_classifier_forward.1} parent=39 // pred_check_branch
          %626 = sbr.rel (%p624) target = $region64
        $region63: #{distilbert_classifier_forward.1} parent=39 // pred_region
          %p627 = scmp.lt.s32.totalorder %s33, 1
          %s628 = scalar_select %p627, %s33, 1
          %s629 = scalar_lea.vmem %s9, %s628
        $region64: #{distilbert_classifier_forward.1} parent=39 // pred_fallthru
          _
        // Predicated region
        $region65: #{distilbert_classifier_forward.1} parent=39 // pred_check
          %p630 = pneg %p293
        $region66: #{distilbert_classifier_forward.1} parent=39 // pred_check_branch
          %632 = sbr.rel (%p630) target = $region68
        $region67: #{distilbert_classifier_forward.1} parent=39 // pred_region
          %p633 = scmp.lt.s32.totalorder %s33, 1
          %s634 = scalar_select %p633, %s33, 1
          %s635 = smul.addr %s634, 32
          %s636 = smul.addr %s635, 4
          %s637 = scalar_lea.vmem %s10, %s636
        $region68: #{distilbert_classifier_forward.1} parent=39 // pred_fallthru
          _
        // Predicated region
        $region69: #{distilbert_classifier_forward.1} parent=39 // pred_check
          %p638 = pneg %p319
        $region70: #{distilbert_classifier_forward.1} parent=39 // pred_check_branch
          %640 = sbr.rel (%p638) target = $region72
        $region71: #{distilbert_classifier_forward.1} parent=39 // pred_region
          %p641 = scmp.lt.s32.totalorder %s33, 1
          %s642 = scalar_select %p641, %s33, 1
          %s643 = smul.addr %s642, 2
          %s644 = scalar_lea.vmem %s11, %s643
        $region72: #{distilbert_classifier_forward.1} parent=39 // pred_fallthru
          _
        // Predicated region
        $region73: #{distilbert_classifier_forward.1} parent=39 // pred_check
          %p645 = pneg %p345
        $region74: #{distilbert_classifier_forward.1} parent=39 // pred_check_branch
          %647 = sbr.rel (%p645) target = $region76
        $region75: #{distilbert_classifier_forward.1} parent=39 // pred_region
          %s648 = sand.u32 %s33, 1
          %s649 = scalar_lea.sflag [#allocation6], %s648
          %s650 = sand.u32 %s335, 1
          %s651 = smul.addr %s650, 128
          %s652 = scalar_lea.vmem [#allocation7], %s651
          %654 = vsyncadd %s649, 0
          %s655 = smul.addr %s33, 32
          %s656 = smul.addr %s655, 4
          %s657 = scalar_lea.hbm %s12, %s656
          %s658 = sshll.u32 %s657, 4
          %s659 = int_to_ptr.hbm [resolvable:$true] %s658
          %s660 = sshll.u32 %s652, 4
          %s661 = int_to_ptr.vmem [resolvable:$true] %s660
          %666 = dma.hbm_to_vmem [thread:$0]  %s659, 2048, %s661, %s649, 64, 64, 4
        $region76: #{distilbert_classifier_forward.1} parent=39 // pred_fallthru
          _
        // Predicated region
        $region77: #{distilbert_classifier_forward.1} parent=39 // pred_check
          %p667 = pneg %p371
        $region78: #{distilbert_classifier_forward.1} parent=39 // pred_check_branch
          %669 = sbr.rel (%p667) target = $region80
        $region79: #{distilbert_classifier_forward.1} parent=39 // pred_region
          %p670 = scmp.lt.s32.totalorder %s33, 1
          %s671 = scalar_select %p670, %s33, 1
          %s672 = scalar_lea.vmem %s13, %s671
        $region80: #{distilbert_classifier_forward.1} parent=39 // pred_fallthru
          _
        // Predicated region
        $region81: #{distilbert_classifier_forward.1} parent=39 // pred_check
          %p673 = pneg %p397
        $region82: #{distilbert_classifier_forward.1} parent=39 // pred_check_branch
          %675 = sbr.rel (%p673) target = $region84
        $region83: #{distilbert_classifier_forward.1} parent=39 // pred_region
          %p676 = scmp.lt.s32.totalorder %s33, 1
          %s677 = scalar_select %p676, %s33, 1
          %s678 = scalar_lea.vmem %s14, %s677
        $region84: #{distilbert_classifier_forward.1} parent=39 // pred_fallthru
          _
        // Predicated region
        $region85: #{distilbert_classifier_forward.1} parent=39 // pred_check
          %p679 = pneg %p423
        $region86: #{distilbert_classifier_forward.1} parent=39 // pred_check_branch
          %681 = sbr.rel (%p679) target = $region88
        $region87: #{distilbert_classifier_forward.1} parent=39 // pred_region
          %p682 = scmp.lt.s32.totalorder %s33, 1
          %s683 = scalar_select %p682, %s33, 1
          %s684 = scalar_lea.vmem %s15, %s683
        $region88: #{distilbert_classifier_forward.1} parent=39 // pred_fallthru
          _
      $region40: #{distilbert_classifier_forward.1} parent=5 // pred_fallthru
        _
      %p685 = scmp.le.s32.totalorder 1, %s33
      %p686 = scmp.lt.s32.totalorder %s33, 3
      %p687 = pnand %p685, %p686
      %p688 = pneg %p687
      // Predicated region
      $region89: #{distilbert_classifier_forward.1} parent=5 // pred_check
        _
      $region90: #{distilbert_classifier_forward.1} parent=5 // pred_check_branch
        %690 = sbr.rel (%p687) target = $region92
      $region91: #{distilbert_classifier_forward.1} parent=5 // pred_region
        %s691 = ssub.s32 %s33, 1
        %s692 = sand.u32 %s130, 1
        %s693 = scalar_lea.sflag [#allocation4], %s692
        %s694 = sand.u32 %s130, 1
        %s695 = smul.addr %s694, 192
        %s696 = scalar_lea.vmem [#allocation3], %s695
        // Predicated region
        $region93: #{distilbert_classifier_forward.1} parent=91 // pred_check
          %p697 = pneg %p143
        $region94: #{distilbert_classifier_forward.1} parent=91 // pred_check_branch
          %699 = sbr.rel (%p697) target = $region96
        $region95: #{distilbert_classifier_forward.1} parent=91 // pred_region
          %701 = dma.done %s693, 3072
        $region96: #{distilbert_classifier_forward.1} parent=91 // pred_fallthru
          _
        %s702 = sand.u32 %s38, 1
        %s703 = scalar_lea.sflag [#allocation6], %s702
        %s704 = sand.u32 %s182, 1
        %s705 = smul.addr %s704, 64
        %s706 = scalar_lea.vmem [#allocation5], %s705
        // Predicated region
        $region97: #{distilbert_classifier_forward.1} parent=91 // pred_check
          %p707 = pneg %p195
        $region98: #{distilbert_classifier_forward.1} parent=91 // pred_check_branch
          %709 = sbr.rel (%p707) target = $region100
        $region99: #{distilbert_classifier_forward.1} parent=91 // pred_region
          %711 = dma.done %s703, 1024
        $region100: #{distilbert_classifier_forward.1} parent=91 // pred_fallthru
          _
        %s712 = sand.u32 %s38, 1
        %s713 = scalar_lea.sflag [#allocation6], %s712
        %s714 = sand.u32 %s338, 1
        %s715 = smul.addr %s714, 128
        %s716 = scalar_lea.vmem [#allocation7], %s715
        // Predicated region
        $region101: #{distilbert_classifier_forward.1} parent=91 // pred_check
          %p717 = pneg %p351
        $region102: #{distilbert_classifier_forward.1} parent=91 // pred_check_branch
          %719 = sbr.rel (%p717) target = $region104
        $region103: #{distilbert_classifier_forward.1} parent=91 // pred_region
          %721 = dma.done %s713, 2048
        $region104: #{distilbert_classifier_forward.1} parent=91 // pred_fallthru
          _
        // Predicated region
        $region105: #{distilbert_classifier_forward.1} parent=91 // pred_check
          %p722 = pneg %p450
        $region106: #{distilbert_classifier_forward.1} parent=91 // pred_check_branch
          %724 = sbr.rel (%p722) target = $region108
        $region107: #{distilbert_classifier_forward.1} parent=91 // pred_region
          %726 = dma.done [#allocation9], 1024
        $region108: #{distilbert_classifier_forward.1} parent=91 // pred_fallthru
          _
        %p727 = pneg %p54
        %p728 = pneg %p51
        %p729 = pneg %p75
        %p730 = pneg %p72
        %p731 = pneg %p96
        %p732 = pneg %p93
        %p733 = pneg %p117
        %p734 = pneg %p114
        %s735 = sand.u32 %s130, 1
        %s736 = scalar_lea.sflag [#allocation4], %s735
        %s737 = sand.u32 %s130, 1
        %s738 = smul.addr %s737, 192
        %s739 = scalar_lea.vmem [#allocation3], %s738
        %p740 = pneg %p143
        %p741 = pneg %p140
        %p742 = scmp.lt.s32.totalorder %s38, 1
        %s743 = scalar_select %p742, %s38, 1
        %s744 = smul.addr %s743, 3
        %s745 = scalar_lea.vmem %s5, %s744
        %p746 = pneg %p169
        %p747 = pneg %p166
        %s748 = sand.u32 %s38, 1
        %s749 = scalar_lea.sflag [#allocation6], %s748
        %s750 = sand.u32 %s182, 1
        %s751 = smul.addr %s750, 64
        %s752 = scalar_lea.vmem [#allocation5], %s751
        %p753 = pneg %p195
        %p754 = pneg %p192
        %p755 = scmp.lt.s32.totalorder %s38, 1
        %s756 = scalar_select %p755, %s38, 1
        %s757 = scalar_lea.vmem %s7, %s756
        %p758 = pneg %p221
        %p759 = pneg %p218
        %p760 = scmp.lt.s32.totalorder %s38, 1
        %s761 = scalar_select %p760, %s38, 1
        %s762 = scalar_lea.vmem %s8, %s761
        %p763 = pneg %p247
        %p764 = pneg %p244
        %p765 = scmp.lt.s32.totalorder %s38, 1
        %s766 = scalar_select %p765, %s38, 1
        %s767 = scalar_lea.vmem %s9, %s766
        %p768 = pneg %p273
        %p769 = pneg %p270
        %p770 = scmp.lt.s32.totalorder %s38, 1
        %s771 = scalar_select %p770, %s38, 1
        %s772 = smul.addr %s771, 32
        %s773 = smul.addr %s772, 4
        %s774 = scalar_lea.vmem %s10, %s773
        %p775 = pneg %p299
        %p776 = pneg %p296
        %p777 = scmp.lt.s32.totalorder %s38, 1
        %s778 = scalar_select %p777, %s38, 1
        %s779 = smul.addr %s778, 2
        %s780 = scalar_lea.vmem %s11, %s779
        %p781 = pneg %p325
        %p782 = pneg %p322
        %s783 = sand.u32 %s38, 1
        %s784 = scalar_lea.sflag [#allocation6], %s783
        %s785 = sand.u32 %s338, 1
        %s786 = smul.addr %s785, 128
        %s787 = scalar_lea.vmem [#allocation7], %s786
        %p788 = pneg %p351
        %p789 = pneg %p348
        %p790 = scmp.lt.s32.totalorder %s38, 1
        %s791 = scalar_select %p790, %s38, 1
        %s792 = scalar_lea.vmem %s13, %s791
        %p793 = pneg %p377
        %p794 = pneg %p374
        %p795 = scmp.lt.s32.totalorder %s38, 1
        %s796 = scalar_select %p795, %s38, 1
        %s797 = scalar_lea.vmem %s14, %s796
        %p798 = pneg %p403
        %p799 = pneg %p400
        %p800 = scmp.lt.s32.totalorder %s38, 1
        %s801 = scalar_select %p800, %s38, 1
        %s802 = scalar_lea.vmem %s15, %s801
        %p803 = pneg %p429
        %p804 = pneg %p426
        %p805 = pneg %p450
        %p806 = pneg %p447
        %p807 = pneg %p471
        %p808 = pneg %p468
        %p809 = pneg %p492
        %p810 = pneg %p489
        %p811 = pneg %p513
        %p812 = pneg %p510
        %p813 = scmp.lt.s32.totalorder %s38, 1
        %s814 = scalar_select %p813, %s38, 1
        %s815 = smul.addr %s814, 3
        %s816 = scalar_lea.vmem %s5, %s815
        %p817 = scmp.lt.s32.totalorder %s38, 1
        %s818 = scalar_select %p817, %s38, 1
        %s819 = scalar_lea.vmem %s7, %s818
        %p820 = scmp.lt.s32.totalorder %s38, 1
        %s821 = scalar_select %p820, %s38, 1
        %s822 = scalar_lea.vmem %s8, %s821
        %p823 = scmp.lt.s32.totalorder %s38, 1
        %s824 = scalar_select %p823, %s38, 1
        %s825 = scalar_lea.vmem %s9, %s824
        %p826 = scmp.lt.s32.totalorder %s38, 1
        %s827 = scalar_select %p826, %s38, 1
        %s828 = smul.addr %s827, 32
        %s829 = smul.addr %s828, 4
        %s830 = scalar_lea.vmem %s10, %s829
        %p831 = scmp.lt.s32.totalorder %s38, 1
        %s832 = scalar_select %p831, %s38, 1
        %s833 = smul.addr %s832, 2
        %s834 = scalar_lea.vmem %s11, %s833
        %p835 = scmp.lt.s32.totalorder %s38, 1
        %s836 = scalar_select %p835, %s38, 1
        %s837 = scalar_lea.vmem %s13, %s836
        %p838 = scmp.lt.s32.totalorder %s38, 1
        %s839 = scalar_select %p838, %s38, 1
        %s840 = scalar_lea.vmem %s14, %s839
        %p841 = scmp.lt.s32.totalorder %s38, 1
        %s842 = scalar_select %p841, %s38, 1
        %s843 = scalar_lea.vmem %s15, %s842
        %p845 = scmp.eq.s32.totalorder %s38, 0
        // Predicated region
        $region109: #{distilbert_classifier_forward.1} parent=91 // pred_check
          %p846 = pneg %p845
        $region110: #{distilbert_classifier_forward.1} parent=91 // pred_check_branch
          %848 = sbr.rel (%p846) target = $region112
        $region111: #{distilbert_classifier_forward.1} parent=91 // pred_region
          %v849 = vld [vmem:[%s0] sm:$0xff]
          %v850 = vld [vmem:[%s0 + $0x8] sm:$0xff]
          %v851 = vld [vmem:[%s2] sm:$0x1]
          %v852 = vld [vmem:[%s3] sm:$0x1]
          %853 = vadd.xlane.f32.xlu0 %v849
          %v854 = vpop.xlane.xlu0 %853
          %855 = vadd.xlane.f32.xlu0 %v850
          %v856 = vpop.xlane.xlu0 %855
          %v857 = vrcp.pop 128.0
          %v858 = vmul.f32 128.0, %v857
          %v859 = vsub.f32 1.0, %v858
          %v860 = vmul.f32 %v857, %v859
          %v861 = vadd.f32 %v857, %v860
          %vm862 = vweird.f32 %v857
          %v863 = vsel %vm862, %v857, %v861
          %v864 = vmul.f32 %v854, %v863
          %v865 = vmul.f32 %v856, %v863
          %v866 = vmul.f32 %v849, %v849
          %v867 = vmul.f32 %v850, %v850
          %868 = vadd.xlane.f32.xlu0 %v866
          %v869 = vpop.xlane.xlu0 %868
          %870 = vadd.xlane.f32.xlu0 %v867
          %v871 = vpop.xlane.xlu0 %870
          %v872 = vmul.f32 %v869, %v863
          %v873 = vmul.f32 %v871, %v863
          %v874 = vmul.f32 %v864, %v864
          %v875 = vmul.f32 %v865, %v865
          %v876 = vsub.f32 %v872, %v874
          %v877 = vsub.f32 %v873, %v875
          %v878 = vsub.f32 %v849, %v864
          %v879 = vsub.f32 %v850, %v865
          %v880 = vadd.f32 %v876, 1e-12
          %v881 = vadd.f32 %v877, 1e-12
          %v882 = vrsqrt.pop %v880
          %v883 = vmul.f32 %v882, %v880
          %v884 = vmul.f32 %v883, %v882
          %v885 = vmul.f32 0.5, %v884
          %v886 = vsub.f32 1.5, %v885
          %v887 = vmul.f32 %v882, %v886
          %vm888 = vweird.f32 %v880
          %vm889 = vweird.f32 %v882
          %vm890 = vmor %vm888, %vm889
          %v891 = vsel %vm890, %v882, %v887
          %v892 = vrsqrt.pop %v881
          %v893 = vmul.f32 %v892, %v881
          %v894 = vmul.f32 %v893, %v892
          %v895 = vmul.f32 0.5, %v894
          %v896 = vsub.f32 1.5, %v895
          %v897 = vmul.f32 %v892, %v896
          %vm898 = vweird.f32 %v881
          %vm899 = vweird.f32 %v892
          %vm900 = vmor %vm898, %vm899
          %v901 = vsel %vm900, %v892, %v897
          %v902 = vmul.f32 %v878, %v891
          %v903 = vmul.f32 %v879, %v901
          %v905 = vperm.slane %v851, 0
          %v907 = vmul.f32 %v902, %v905
          %v908 = vmul.f32 %v903, %v905
          %v910 = vperm.slane %v852, 0
          %v912 = vadd.f32 %v907, %v910
          %v913 = vadd.f32 %v908, %v910
          %914 = vst [vmem:[#allocation2] sm:$0xff] %v912
          %915 = vst [vmem:[#allocation2 + $0x8] sm:$0xff] %v913
        $region112: #{distilbert_classifier_forward.1} parent=91 // pred_fallthru
          _
        %v916 = vld [vmem:[#allocation2] sm:$0xff]
        %v917 = vld [vmem:[#allocation2 + $0x8] sm:$0xff]
        %v918 = vpack.c.bf16 %v917, %v916
        %v919 = vld [vmem:[%s1] sm:$0xff]
        %v920 = vld [vmem:[%s1 + $0x8] sm:$0xff]
        %v921 = vld [vmem:[%s696] sm:$0xff]
        %v922 = vld [vmem:[%s696 + $0x8] sm:$0xf]
        %v923 = vld [vmem:[%s696 + $0xc] sm:$0xff]
        %v924 = vld [vmem:[%s696 + $0x14] sm:$0xf]
        %v925 = vld [vmem:[%s696 + $0x18] sm:$0xff]
        %v926 = vld [vmem:[%s696 + $0x20] sm:$0xf]
        %v927 = vld [vmem:[%s696 + $0x24] sm:$0xff]
        %v928 = vld [vmem:[%s696 + $0x2c] sm:$0xf]
        %v929 = vld [vmem:[%s696 + $0x30] sm:$0xff]
        %v930 = vld [vmem:[%s696 + $0x38] sm:$0xf]
        %v931 = vld [vmem:[%s696 + $0x3c] sm:$0xff]
        %v932 = vld [vmem:[%s696 + $0x44] sm:$0xf]
        %v933 = vld [vmem:[%s696 + $0x48] sm:$0xff]
        %v934 = vld [vmem:[%s696 + $0x50] sm:$0xf]
        %v935 = vld [vmem:[%s696 + $0x54] sm:$0xff]
        %v936 = vld [vmem:[%s696 + $0x5c] sm:$0xf]
        %v937 = vld [vmem:[%s696 + $0x60] sm:$0xff]
        %v938 = vld [vmem:[%s696 + $0x68] sm:$0xf]
        %v939 = vld [vmem:[%s696 + $0x6c] sm:$0xff]
        %v940 = vld [vmem:[%s696 + $0x74] sm:$0xf]
        %v941 = vld [vmem:[%s696 + $0x78] sm:$0xff]
        %v942 = vld [vmem:[%s696 + $0x80] sm:$0xf]
        %v943 = vld [vmem:[%s696 + $0x84] sm:$0xff]
        %v944 = vld [vmem:[%s696 + $0x8c] sm:$0xf]
        %v945 = vld [vmem:[%s696 + $0x90] sm:$0xff]
        %v946 = vld [vmem:[%s696 + $0x98] sm:$0xf]
        %v947 = vld [vmem:[%s696 + $0x9c] sm:$0xff]
        %v948 = vld [vmem:[%s696 + $0xa4] sm:$0xf]
        %v949 = vld [vmem:[%s696 + $0xa8] sm:$0xff]
        %v950 = vld [vmem:[%s696 + $0xb0] sm:$0xf]
        %v951 = vld [vmem:[%s696 + $0xb4] sm:$0xff]
        %v952 = vld [vmem:[%s696 + $0xbc] sm:$0xf]
        %v953 = vld [vmem:[%s816] sm:$0x7]
        %v955 = vperm.slane %v953, 0
        %v956 = vperm.slane %v953, 1
        %v957 = vperm.slane %v953, 2
        %v993 = vunpack.c.l.b16 %v921
        %v994 = vunpack.c.h.b16 %v921
        %v995 = vunpack.c.l.b16 %v922
        %v996 = vunpack.c.l.b16 %v923
        %v997 = vunpack.c.h.b16 %v923
        %v998 = vunpack.c.l.b16 %v924
        %v999 = vunpack.c.l.b16 %v925
        %v1000 = vunpack.c.h.b16 %v925
        %v1001 = vunpack.c.l.b16 %v926
        %v1002 = vunpack.c.l.b16 %v927
        %v1003 = vunpack.c.h.b16 %v927
        %v1004 = vunpack.c.l.b16 %v928
        %v1005 = vunpack.c.l.b16 %v929
        %v1006 = vunpack.c.h.b16 %v929
        %v1007 = vunpack.c.l.b16 %v930
        %v1008 = vunpack.c.l.b16 %v931
        %v1009 = vunpack.c.h.b16 %v931
        %v1010 = vunpack.c.l.b16 %v932
        %v1011 = vunpack.c.l.b16 %v933
        %v1012 = vunpack.c.h.b16 %v933
        %v1013 = vunpack.c.l.b16 %v934
        %v1014 = vunpack.c.l.b16 %v935
        %v1015 = vunpack.c.h.b16 %v935
        %v1016 = vunpack.c.l.b16 %v936
        %v1017 = vunpack.c.l.b16 %v937
        %v1018 = vunpack.c.h.b16 %v937
        %v1019 = vunpack.c.l.b16 %v938
        %v1020 = vunpack.c.l.b16 %v939
        %v1021 = vunpack.c.h.b16 %v939
        %v1022 = vunpack.c.l.b16 %v940
        %v1023 = vunpack.c.l.b16 %v941
        %v1024 = vunpack.c.h.b16 %v941
        %v1025 = vunpack.c.l.b16 %v942
        %v1026 = vunpack.c.l.b16 %v943
        %v1027 = vunpack.c.h.b16 %v943
        %v1028 = vunpack.c.l.b16 %v944
        %v1029 = vunpack.c.l.b16 %v945
        %v1030 = vunpack.c.h.b16 %v945
        %v1031 = vunpack.c.l.b16 %v946
        %v1032 = vunpack.c.l.b16 %v947
        %v1033 = vunpack.c.h.b16 %v947
        %v1034 = vunpack.c.l.b16 %v948
        %v1035 = vunpack.c.l.b16 %v949
        %v1036 = vunpack.c.h.b16 %v949
        %v1037 = vunpack.c.l.b16 %v950
        %v1038 = vunpack.c.l.b16 %v951
        %v1039 = vunpack.c.h.b16 %v951
        %v1040 = vunpack.c.l.b16 %v952
        %v1041 = vpack.c.b16 %v996, %v993
        %v1042 = vpack.c.b16 %v997, %v994
        %v1043 = vpack.c.b16 %v998, %v995
        %v1044 = vpack.c.b16 %v1002, %v999
        %v1045 = vpack.c.b16 %v1003, %v1000
        %v1046 = vpack.c.b16 %v1004, %v1001
        %v1047 = vpack.c.b16 %v1008, %v1005
        %v1048 = vpack.c.b16 %v1009, %v1006
        %v1049 = vpack.c.b16 %v1010, %v1007
        %v1050 = vpack.c.b16 %v1014, %v1011
        %v1051 = vpack.c.b16 %v1015, %v1012
        %v1052 = vpack.c.b16 %v1016, %v1013
        %v1053 = vpack.c.b16 %v1020, %v1017
        %v1054 = vpack.c.b16 %v1021, %v1018
        %v1055 = vpack.c.b16 %v1022, %v1019
        %v1056 = vpack.c.b16 %v1026, %v1023
        %v1057 = vpack.c.b16 %v1027, %v1024
        %v1058 = vpack.c.b16 %v1028, %v1025
        %v1059 = vpack.c.b16 %v1032, %v1029
        %v1060 = vpack.c.b16 %v1033, %v1030
        %v1061 = vpack.c.b16 %v1034, %v1031
        %v1062 = vpack.c.b16 %v1038, %v1035
        %v1063 = vpack.c.b16 %v1039, %v1036
        %v1064 = vpack.c.b16 %v1040, %v1037
        %1089 = vmatpush.bf16.msra.mxu0 %v1062
        %1090 = vmatpush.bf16.msra.mxu0 %v1059
        %1091 = vmatpush.bf16.msra.mxu0 %v1056
        %1092 = vmatpush.bf16.msra.mxu0 %v1053
        %1093 = vmatpush.bf16.msra.mxu0 %v1050
        %1094 = vmatpush.bf16.msra.mxu0 %v1047
        %1095 = vmatpush.bf16.msra.mxu0 %v1044
        %1096 = vmatpush.bf16.msra.mxu0 %v1041
        %1097 = vmatmul.bf16.gmra.mxu0 %v918
        %v1098 = vpop.f32.mrf.mxu0
        %v1099 = vadd.f32 %v955, %v1098
        %v1100 = vpop.f32.mrf.mxu0
        %v1101 = vadd.f32 %v955, %v1100
        %1102 = vdwg.mxu0
        %1103 = vmatpush.bf16.msra.mxu0 %v1063
        %1104 = vmatpush.bf16.msra.mxu0 %v1060
        %1105 = vmatpush.bf16.msra.mxu0 %v1057
        %1106 = vmatpush.bf16.msra.mxu0 %v1054
        %1107 = vmatpush.bf16.msra.mxu0 %v1051
        %1108 = vmatpush.bf16.msra.mxu0 %v1048
        %1109 = vmatpush.bf16.msra.mxu0 %v1045
        %1110 = vmatpush.bf16.msra.mxu0 %v1042
        %1111 = vmatmul.bf16.gmra.mxu0 %v918
        %v1112 = vpop.f32.mrf.mxu0
        %v1113 = vadd.f32 %v956, %v1112
        %v1114 = vpop.f32.mrf.mxu0
        %v1115 = vadd.f32 %v956, %v1114
        %1116 = vdwg.mxu0
        %1117 = vmatpush.bf16.msra.mxu0 %v1064
        %1118 = vmatpush.bf16.msra.mxu0 %v1061
        %1119 = vmatpush.bf16.msra.mxu0 %v1058
        %1120 = vmatpush.bf16.msra.mxu0 %v1055
        %1121 = vmatpush.bf16.msra.mxu0 %v1052
        %1122 = vmatpush.bf16.msra.mxu0 %v1049
        %1123 = vmatpush.bf16.msra.mxu0 %v1046
        %1124 = vmatpush.bf16.msra.mxu0 %v1043
        %1125 = vmatmul.bf16.gmra.mxu0 %v918
        %v1126 = vpop.f32.mrf.mxu0
        %v1127 = vadd.f32 %v957, %v1126
        %v1128 = vpop.f32.mrf.mxu0
        %v1129 = vadd.f32 %v957, %v1128
        %1130 = vdwg.mxu0
        %v1131 = vpack.c.bf16 %v1113, %v1099
        %v1132 = vpack.c.bf16 %v1127, %v1127
        %v1133 = vpack.c.bf16 %v1115, %v1101
        %v1134 = vpack.c.bf16 %v1129, %v1129
        %v1137 = vunpack.c.l.b16 %v1131
        %v1138 = vunpack.c.l.b16 %v1133
        %v1139 = vpack.c.b16 %v1138, %v1137
        %v1140 = vunpack.c.h.b16 %v1131
        %v1141 = vunpack.c.h.b16 %v1133
        %v1142 = vpack.c.b16 %v1141, %v1140
        %vm1143 = vcmask 261120
        %v1145 = vsel %vm1143, %v1139, 0
        %v1148 = vsel %vm1143, %v1142, 0
        %1150 = vmatpush.bf16.xpose.msra.mxu0 0
        %1151 = vmatpush.bf16.xpose.msra.mxu0 0
        %1152 = vmatpush.bf16.xpose.msra.mxu0 0
        %1153 = vmatpush.bf16.xpose.msra.mxu0 0
        %1154 = vmatpush.bf16.xpose.msra.mxu0 0
        %1155 = vmatpush.bf16.xpose.msra.mxu0 0
        %1156 = vmatpush.bf16.xpose.msra.mxu0 0
        %1157 = vmatpush.bf16.xpose.msra.mxu0 %v1148
        %1158 = vmatmul.bf16.gmra.mxu0 %v1145
        %v1159 = vpop.f32.mrf.mxu0
        %v1160 = vadd.f32 0.0, %v1159
        %v1161 = vpop.f32.mrf.mxu0
        %v1162 = vadd.f32 0.0, %v1161
        %1163 = vdwg.mxu0
        %v1164 = vmul.f32 %v1160, 0.17677669
        %v1165 = vmul.f32 %v1162, 0.17677669
        %v1166 = vadd.f32 %v1164, %v919
        %v1167 = vadd.f32 %v1165, %v920
        %vm1168 = vcmask 130048
        %v1169 = vsel %vm1168, %v1166, -inf
        %1170 = vmax.xlane.f32.xlu0 %v1169
        %v1171 = vpop.xlane.xlu0 %1170
        %v1172 = vsel %vm1168, %v1167, -inf
        %1173 = vmax.xlane.f32.xlu0 %v1172
        %v1174 = vpop.xlane.xlu0 %1173
        %v1175 = vsub.f32 %v1166, %v1171
        %v1176 = vsub.f32 %v1167, %v1174
        %v1177 = vmul.f32 %v1175, 1.442695
        %v1178 = vpow.pop %v1177
        %v1179 = vmul.f32 %v1176, 1.442695
        %v1180 = vpow.pop %v1179
        %v1181 = vsel %vm1168, %v1178, 0.0
        %1182 = vadd.xlane.f32.xlu0 %v1181
        %v1183 = vpop.xlane.xlu0 %1182
        %v1184 = vsel %vm1168, %v1180, 0.0
        %1185 = vadd.xlane.f32.xlu0 %v1184
        %v1186 = vpop.xlane.xlu0 %1185
        %v1187 = vrcp.pop %v1183
        %v1188 = vrcp.pop %v1186
        %v1189 = vmul.f32 %v1178, %v1187
        %v1190 = vmul.f32 %v1180, %v1188
        %v1191 = vpack.c.bf16 %v1190, %v1189
        %v1194 = vunpack.c.l.b16 %v1132
        %v1195 = vunpack.c.l.b16 %v1134
        %v1196 = vpack.c.b16 %v1195, %v1194
        %v1199 = vsel %vm1168, %v1191, 0
        %1201 = vmatpush.bf16.msra.mxu0 0
        %1202 = vmatpush.bf16.msra.mxu0 0
        %1203 = vmatpush.bf16.msra.mxu0 0
        %1204 = vmatpush.bf16.msra.mxu0 0
        %1205 = vmatpush.bf16.msra.mxu0 0
        %1206 = vmatpush.bf16.msra.mxu0 0
        %1207 = vmatpush.bf16.msra.mxu0 0
        %1208 = vmatpush.bf16.msra.mxu0 %v1196
        %1209 = vmatmul.bf16.gmra.mxu0 %v1199
        %v1210 = vpop.f32.mrf.mxu0
        %v1211 = vadd.f32 0.0, %v1210
        %v1212 = vpop.f32.mrf.mxu0
        %v1213 = vadd.f32 0.0, %v1212
        %1214 = vdwg.mxu0
        %1215 = vrot.lane.b32.xlu0 %v1139, 96
        %v1216 = vpop.permute.xlu0 %1215
        %1217 = vrot.lane.b32.xlu0 %v1142, 96
        %v1218 = vpop.permute.xlu0 %1217
        %v1220 = vsel %vm1143, %v1216, 0
        %v1223 = vsel %vm1143, %v1218, 0
        %1225 = vmatpush.bf16.xpose.msra.mxu0 0
        %1226 = vmatpush.bf16.xpose.msra.mxu0 0
        %1227 = vmatpush.bf16.xpose.msra.mxu0 0
        %1228 = vmatpush.bf16.xpose.msra.mxu0 0
        %1229 = vmatpush.bf16.xpose.msra.mxu0 0
        %1230 = vmatpush.bf16.xpose.msra.mxu0 0
        %1231 = vmatpush.bf16.xpose.msra.mxu0 0
        %1232 = vmatpush.bf16.xpose.msra.mxu0 %v1223
        %1233 = vmatmul.bf16.gmra.mxu0 %v1220
        %v1234 = vpop.f32.mrf.mxu0
        %v1235 = vadd.f32 0.0, %v1234
        %v1236 = vpop.f32.mrf.mxu0
        %v1237 = vadd.f32 0.0, %v1236
        %1238 = vdwg.mxu0
        %v1239 = vmul.f32 %v1235, 0.17677669
        %v1240 = vmul.f32 %v1237, 0.17677669
        %v1241 = vadd.f32 %v1239, %v919
        %v1242 = vadd.f32 %v1240, %v920
        %v1243 = vsel %vm1168, %v1241, -inf
        %1244 = vmax.xlane.f32.xlu0 %v1243
        %v1245 = vpop.xlane.xlu0 %1244
        %v1246 = vsel %vm1168, %v1242, -inf
        %1247 = vmax.xlane.f32.xlu0 %v1246
        %v1248 = vpop.xlane.xlu0 %1247
        %v1249 = vsub.f32 %v1241, %v1245
        %v1250 = vsub.f32 %v1242, %v1248
        %v1251 = vmul.f32 %v1249, 1.442695
        %v1252 = vpow.pop %v1251
        %v1253 = vmul.f32 %v1250, 1.442695
        %v1254 = vpow.pop %v1253
        %v1255 = vsel %vm1168, %v1252, 0.0
        %1256 = vadd.xlane.f32.xlu0 %v1255
        %v1257 = vpop.xlane.xlu0 %1256
        %v1258 = vsel %vm1168, %v1254, 0.0
        %1259 = vadd.xlane.f32.xlu0 %v1258
        %v1260 = vpop.xlane.xlu0 %1259
        %v1261 = vrcp.pop %v1257
        %v1262 = vrcp.pop %v1260
        %v1263 = vmul.f32 %v1252, %v1261
        %v1264 = vmul.f32 %v1254, %v1262
        %v1265 = vpack.c.bf16 %v1264, %v1263
        %1266 = vrot.lane.b32.xlu0 %v1196, 96
        %v1267 = vpop.permute.xlu0 %1266
        %v1270 = vsel %vm1168, %v1265, 0
        %1272 = vmatpush.bf16.msra.mxu0 0
        %1273 = vmatpush.bf16.msra.mxu0 0
        %1274 = vmatpush.bf16.msra.mxu0 0
        %1275 = vmatpush.bf16.msra.mxu0 0
        %1276 = vmatpush.bf16.msra.mxu0 0
        %1277 = vmatpush.bf16.msra.mxu0 0
        %1278 = vmatpush.bf16.msra.mxu0 0
        %1279 = vmatpush.bf16.msra.mxu0 %v1267
        %1280 = vmatmul.bf16.gmra.mxu0 %v1270
        %v1281 = vpop.f32.mrf.mxu0
        %v1282 = vadd.f32 0.0, %v1281
        %v1283 = vpop.f32.mrf.mxu0
        %v1284 = vadd.f32 0.0, %v1283
        %1285 = vdwg.mxu0
        %1286 = vrot.lane.b32.xlu0 %v1139, 64
        %v1287 = vpop.permute.xlu0 %1286
        %1288 = vrot.lane.b32.xlu0 %v1142, 64
        %v1289 = vpop.permute.xlu0 %1288
        %v1291 = vsel %vm1143, %v1287, 0
        %v1294 = vsel %vm1143, %v1289, 0
        %1296 = vmatpush.bf16.xpose.msra.mxu0 0
        %1297 = vmatpush.bf16.xpose.msra.mxu0 0
        %1298 = vmatpush.bf16.xpose.msra.mxu0 0
        %1299 = vmatpush.bf16.xpose.msra.mxu0 0
        %1300 = vmatpush.bf16.xpose.msra.mxu0 0
        %1301 = vmatpush.bf16.xpose.msra.mxu0 0
        %1302 = vmatpush.bf16.xpose.msra.mxu0 0
        %1303 = vmatpush.bf16.xpose.msra.mxu0 %v1294
        %1304 = vmatmul.bf16.gmra.mxu0 %v1291
        %v1305 = vpop.f32.mrf.mxu0
        %v1306 = vadd.f32 0.0, %v1305
        %v1307 = vpop.f32.mrf.mxu0
        %v1308 = vadd.f32 0.0, %v1307
        %1309 = vdwg.mxu0
        %v1310 = vmul.f32 %v1306, 0.17677669
        %v1311 = vmul.f32 %v1308, 0.17677669
        %v1312 = vadd.f32 %v1310, %v919
        %v1313 = vadd.f32 %v1311, %v920
        %v1314 = vsel %vm1168, %v1312, -inf
        %1315 = vmax.xlane.f32.xlu0 %v1314
        %v1316 = vpop.xlane.xlu0 %1315
        %v1317 = vsel %vm1168, %v1313, -inf
        %1318 = vmax.xlane.f32.xlu0 %v1317
        %v1319 = vpop.xlane.xlu0 %1318
        %v1320 = vsub.f32 %v1312, %v1316
        %v1321 = vsub.f32 %v1313, %v1319
        %v1322 = vmul.f32 %v1320, 1.442695
        %v1323 = vpow.pop %v1322
        %v1324 = vmul.f32 %v1321, 1.442695
        %v1325 = vpow.pop %v1324
        %v1326 = vsel %vm1168, %v1323, 0.0
        %1327 = vadd.xlane.f32.xlu0 %v1326
        %v1328 = vpop.xlane.xlu0 %1327
        %v1329 = vsel %vm1168, %v1325, 0.0
        %1330 = vadd.xlane.f32.xlu0 %v1329
        %v1331 = vpop.xlane.xlu0 %1330
        %v1332 = vrcp.pop %v1328
        %v1333 = vrcp.pop %v1331
        %v1334 = vmul.f32 %v1323, %v1332
        %v1335 = vmul.f32 %v1325, %v1333
        %v1336 = vpack.c.bf16 %v1335, %v1334
        %1337 = vrot.lane.b32.xlu0 %v1196, 64
        %v1338 = vpop.permute.xlu0 %1337
        %v1341 = vsel %vm1168, %v1336, 0
        %1343 = vmatpush.bf16.msra.mxu0 0
        %1344 = vmatpush.bf16.msra.mxu0 0
        %1345 = vmatpush.bf16.msra.mxu0 0
        %1346 = vmatpush.bf16.msra.mxu0 0
        %1347 = vmatpush.bf16.msra.mxu0 0
        %1348 = vmatpush.bf16.msra.mxu0 0
        %1349 = vmatpush.bf16.msra.mxu0 0
        %1350 = vmatpush.bf16.msra.mxu0 %v1338
        %1351 = vmatmul.bf16.gmra.mxu0 %v1341
        %v1352 = vpop.f32.mrf.mxu0
        %v1353 = vadd.f32 0.0, %v1352
        %v1354 = vpop.f32.mrf.mxu0
        %v1355 = vadd.f32 0.0, %v1354
        %1356 = vdwg.mxu0
        %1357 = vrot.lane.b32.xlu0 %v1139, 32
        %v1358 = vpop.permute.xlu0 %1357
        %1359 = vrot.lane.b32.xlu0 %v1142, 32
        %v1360 = vpop.permute.xlu0 %1359
        %v1362 = vsel %vm1143, %v1358, 0
        %v1365 = vsel %vm1143, %v1360, 0
        %1367 = vmatpush.bf16.xpose.msra.mxu0 0
        %1368 = vmatpush.bf16.xpose.msra.mxu0 0
        %1369 = vmatpush.bf16.xpose.msra.mxu0 0
        %1370 = vmatpush.bf16.xpose.msra.mxu0 0
        %1371 = vmatpush.bf16.xpose.msra.mxu0 0
        %1372 = vmatpush.bf16.xpose.msra.mxu0 0
        %1373 = vmatpush.bf16.xpose.msra.mxu0 0
        %1374 = vmatpush.bf16.xpose.msra.mxu0 %v1365
        %1375 = vmatmul.bf16.gmra.mxu0 %v1362
        %v1376 = vpop.f32.mrf.mxu0
        %v1377 = vadd.f32 0.0, %v1376
        %v1378 = vpop.f32.mrf.mxu0
        %v1379 = vadd.f32 0.0, %v1378
        %1380 = vdwg.mxu0
        %v1381 = vmul.f32 %v1377, 0.17677669
        %v1382 = vmul.f32 %v1379, 0.17677669
        %v1383 = vadd.f32 %v1381, %v919
        %v1384 = vadd.f32 %v1382, %v920
        %v1385 = vsel %vm1168, %v1383, -inf
        %1386 = vmax.xlane.f32.xlu0 %v1385
        %v1387 = vpop.xlane.xlu0 %1386
        %v1388 = vsel %vm1168, %v1384, -inf
        %1389 = vmax.xlane.f32.xlu0 %v1388
        %v1390 = vpop.xlane.xlu0 %1389
        %v1391 = vsub.f32 %v1383, %v1387
        %v1392 = vsub.f32 %v1384, %v1390
        %v1393 = vmul.f32 %v1391, 1.442695
        %v1394 = vpow.pop %v1393
        %v1395 = vmul.f32 %v1392, 1.442695
        %v1396 = vpow.pop %v1395
        %v1397 = vsel %vm1168, %v1394, 0.0
        %1398 = vadd.xlane.f32.xlu0 %v1397
        %v1399 = vpop.xlane.xlu0 %1398
        %v1400 = vsel %vm1168, %v1396, 0.0
        %1401 = vadd.xlane.f32.xlu0 %v1400
        %v1402 = vpop.xlane.xlu0 %1401
        %v1403 = vrcp.pop %v1399
        %v1404 = vrcp.pop %v1402
        %v1405 = vmul.f32 %v1394, %v1403
        %v1406 = vmul.f32 %v1396, %v1404
        %v1407 = vpack.c.bf16 %v1406, %v1405
        %1408 = vrot.lane.b32.xlu0 %v1196, 32
        %v1409 = vpop.permute.xlu0 %1408
        %v1412 = vsel %vm1168, %v1407, 0
        %1414 = vmatpush.bf16.msra.mxu0 0
        %1415 = vmatpush.bf16.msra.mxu0 0
        %1416 = vmatpush.bf16.msra.mxu0 0
        %1417 = vmatpush.bf16.msra.mxu0 0
        %1418 = vmatpush.bf16.msra.mxu0 0
        %1419 = vmatpush.bf16.msra.mxu0 0
        %1420 = vmatpush.bf16.msra.mxu0 0
        %1421 = vmatpush.bf16.msra.mxu0 %v1409
        %1422 = vmatmul.bf16.gmra.mxu0 %v1412
        %v1423 = vpop.f32.mrf.mxu0
        %v1424 = vadd.f32 0.0, %v1423
        %v1425 = vpop.f32.mrf.mxu0
        %v1426 = vadd.f32 0.0, %v1425
        %1427 = vdwg.mxu0
        %1430 = vrot.lane.b32.xlu0 %v1282, 32
        %v1431 = vpop.permute.xlu0 %1430
        %1432 = vrot.lane.b32.xlu0 %v1284, 32
        %v1433 = vpop.permute.xlu0 %1432
        %1438 = vrot.lane.b32.xlu0 %v1353, 64
        %v1439 = vpop.permute.xlu0 %1438
        %1440 = vrot.lane.b32.xlu0 %v1355, 64
        %v1441 = vpop.permute.xlu0 %1440
        %1446 = vrot.lane.b32.xlu0 %v1424, 96
        %v1447 = vpop.permute.xlu0 %1446
        %1448 = vrot.lane.b32.xlu0 %v1426, 96
        %v1449 = vpop.permute.xlu0 %1448
        %v1452 = vsel %vm1143, %v1211, %v1431
        %v1453 = vsel %vm1143, %v1213, %v1433
        %vm1454 = vcmask 523264
        %v1455 = vsel %vm1454, %v1452, %v1439
        %v1456 = vsel %vm1454, %v1453, %v1441
        %vm1457 = vcmask 785408
        %v1458 = vsel %vm1457, %v1455, %v1447
        %v1459 = vsel %vm1457, %v1456, %v1449
        %v1460 = vpack.c.bf16 %v1459, %v1458
        %v1461 = vld [vmem:[%s706] sm:$0xf]
        %v1462 = vld [vmem:[%s706 + $0x4] sm:$0xf]
        %v1463 = vld [vmem:[%s706 + $0x8] sm:$0xf]
        %v1464 = vld [vmem:[%s706 + $0xc] sm:$0xf]
        %v1465 = vld [vmem:[%s706 + $0x10] sm:$0xf]
        %v1466 = vld [vmem:[%s706 + $0x14] sm:$0xf]
        %v1467 = vld [vmem:[%s706 + $0x18] sm:$0xf]
        %v1468 = vld [vmem:[%s706 + $0x1c] sm:$0xf]
        %v1469 = vld [vmem:[%s706 + $0x20] sm:$0xf]
        %v1470 = vld [vmem:[%s706 + $0x24] sm:$0xf]
        %v1471 = vld [vmem:[%s706 + $0x28] sm:$0xf]
        %v1472 = vld [vmem:[%s706 + $0x2c] sm:$0xf]
        %v1473 = vld [vmem:[%s706 + $0x30] sm:$0xf]
        %v1474 = vld [vmem:[%s706 + $0x34] sm:$0xf]
        %v1475 = vld [vmem:[%s706 + $0x38] sm:$0xf]
        %v1476 = vld [vmem:[%s706 + $0x3c] sm:$0xf]
        %v1477 = vld [vmem:[%s819] sm:$0x1]
        %v1479 = vperm.slane %v1477, 0
        %v1497 = vunpack.c.l.b16 %v1461
        %v1498 = vunpack.c.l.b16 %v1462
        %v1499 = vunpack.c.l.b16 %v1463
        %v1500 = vunpack.c.l.b16 %v1464
        %v1501 = vunpack.c.l.b16 %v1465
        %v1502 = vunpack.c.l.b16 %v1466
        %v1503 = vunpack.c.l.b16 %v1467
        %v1504 = vunpack.c.l.b16 %v1468
        %v1505 = vunpack.c.l.b16 %v1469
        %v1506 = vunpack.c.l.b16 %v1470
        %v1507 = vunpack.c.l.b16 %v1471
        %v1508 = vunpack.c.l.b16 %v1472
        %v1509 = vunpack.c.l.b16 %v1473
        %v1510 = vunpack.c.l.b16 %v1474
        %v1511 = vunpack.c.l.b16 %v1475
        %v1512 = vunpack.c.l.b16 %v1476
        %v1513 = vpack.c.b16 %v1498, %v1497
        %v1514 = vpack.c.b16 %v1500, %v1499
        %v1515 = vpack.c.b16 %v1502, %v1501
        %v1516 = vpack.c.b16 %v1504, %v1503
        %v1517 = vpack.c.b16 %v1506, %v1505
        %v1518 = vpack.c.b16 %v1508, %v1507
        %v1519 = vpack.c.b16 %v1510, %v1509
        %v1520 = vpack.c.b16 %v1512, %v1511
        %1529 = vmatpush.bf16.msra.mxu0 %v1520
        %1530 = vmatpush.bf16.msra.mxu0 %v1519
        %1531 = vmatpush.bf16.msra.mxu0 %v1518
        %1532 = vmatpush.bf16.msra.mxu0 %v1517
        %1533 = vmatpush.bf16.msra.mxu0 %v1516
        %1534 = vmatpush.bf16.msra.mxu0 %v1515
        %1535 = vmatpush.bf16.msra.mxu0 %v1514
        %1536 = vmatpush.bf16.msra.mxu0 %v1513
        %1537 = vmatmul.bf16.gmra.mxu0 %v1460
        %v1538 = vpop.f32.mrf.mxu0
        %v1539 = vadd.f32 %v1479, %v1538
        %v1540 = vpop.f32.mrf.mxu0
        %v1541 = vadd.f32 %v1479, %v1540
        %1542 = vdwg.mxu0
        %v1543 = vadd.f32 %v1539, %v916
        %v1544 = vadd.f32 %v1541, %v917
        %v1545 = vld [vmem:[%s822] sm:$0x1]
        %v1546 = vld [vmem:[%s825] sm:$0x1]
        %1547 = vadd.xlane.f32.xlu0 %v1543
        %v1548 = vpop.xlane.xlu0 %1547
        %1549 = vadd.xlane.f32.xlu0 %v1544
        %v1550 = vpop.xlane.xlu0 %1549
        %v1551 = vrcp.pop 128.0
        %v1552 = vmul.f32 128.0, %v1551
        %v1553 = vsub.f32 1.0, %v1552
        %v1554 = vmul.f32 %v1551, %v1553
        %v1555 = vadd.f32 %v1551, %v1554
        %vm1556 = vweird.f32 %v1551
        %v1557 = vsel %vm1556, %v1551, %v1555
        %v1558 = vmul.f32 %v1548, %v1557
        %v1559 = vmul.f32 %v1550, %v1557
        %v1560 = vmul.f32 %v1543, %v1543
        %v1561 = vmul.f32 %v1544, %v1544
        %1562 = vadd.xlane.f32.xlu0 %v1560
        %v1563 = vpop.xlane.xlu0 %1562
        %1564 = vadd.xlane.f32.xlu0 %v1561
        %v1565 = vpop.xlane.xlu0 %1564
        %v1566 = vmul.f32 %v1563, %v1557
        %v1567 = vmul.f32 %v1565, %v1557
        %v1568 = vmul.f32 %v1558, %v1558
        %v1569 = vmul.f32 %v1559, %v1559
        %v1570 = vsub.f32 %v1566, %v1568
        %v1571 = vsub.f32 %v1567, %v1569
        %v1572 = vsub.f32 %v1543, %v1558
        %v1573 = vsub.f32 %v1544, %v1559
        %v1574 = vadd.f32 %v1570, 1e-12
        %v1575 = vadd.f32 %v1571, 1e-12
        %v1576 = vrsqrt.pop %v1574
        %v1577 = vmul.f32 %v1576, %v1574
        %v1578 = vmul.f32 %v1577, %v1576
        %v1579 = vmul.f32 0.5, %v1578
        %v1580 = vsub.f32 1.5, %v1579
        %v1581 = vmul.f32 %v1576, %v1580
        %vm1582 = vweird.f32 %v1574
        %vm1583 = vweird.f32 %v1576
        %vm1584 = vmor %vm1582, %vm1583
        %v1585 = vsel %vm1584, %v1576, %v1581
        %v1586 = vrsqrt.pop %v1575
        %v1587 = vmul.f32 %v1586, %v1575
        %v1588 = vmul.f32 %v1587, %v1586
        %v1589 = vmul.f32 0.5, %v1588
        %v1590 = vsub.f32 1.5, %v1589
        %v1591 = vmul.f32 %v1586, %v1590
        %vm1592 = vweird.f32 %v1575
        %vm1593 = vweird.f32 %v1586
        %vm1594 = vmor %vm1592, %vm1593
        %v1595 = vsel %vm1594, %v1586, %v1591
        %v1596 = vmul.f32 %v1572, %v1585
        %v1597 = vmul.f32 %v1573, %v1595
        %v1599 = vperm.slane %v1545, 0
        %v1601 = vmul.f32 %v1596, %v1599
        %v1602 = vmul.f32 %v1597, %v1599
        %v1604 = vperm.slane %v1546, 0
        %v1606 = vadd.f32 %v1601, %v1604
        %v1607 = vadd.f32 %v1602, %v1604
        %v1608 = vpack.c.bf16 %v1607, %v1606
        %v1609 = vld [vmem:[%s830] sm:$0xff]
        %v1610 = vld [vmem:[%s830 + $0x8] sm:$0xff]
        %v1611 = vld [vmem:[%s830 + $0x10] sm:$0xff]
        %v1612 = vld [vmem:[%s830 + $0x18] sm:$0xff]
        %v1613 = vld [vmem:[%s830 + $0x20] sm:$0xff]
        %v1614 = vld [vmem:[%s830 + $0x28] sm:$0xff]
        %v1615 = vld [vmem:[%s830 + $0x30] sm:$0xff]
        %v1616 = vld [vmem:[%s830 + $0x38] sm:$0xff]
        %v1617 = vld [vmem:[%s830 + $0x40] sm:$0xff]
        %v1618 = vld [vmem:[%s830 + $0x48] sm:$0xff]
        %v1619 = vld [vmem:[%s830 + $0x50] sm:$0xff]
        %v1620 = vld [vmem:[%s830 + $0x58] sm:$0xff]
        %v1621 = vld [vmem:[%s830 + $0x60] sm:$0xff]
        %v1622 = vld [vmem:[%s830 + $0x68] sm:$0xff]
        %v1623 = vld [vmem:[%s830 + $0x70] sm:$0xff]
        %v1624 = vld [vmem:[%s830 + $0x78] sm:$0xff]
        %v1625 = vld [vmem:[%s834] sm:$0x3]
        %v1627 = vperm.slane %v1625, 0
        %v1628 = vperm.slane %v1625, 1
        %v1647 = vunpack.c.l.b16 %v1609
        %v1648 = vunpack.c.h.b16 %v1609
        %v1649 = vunpack.c.l.b16 %v1610
        %v1650 = vunpack.c.h.b16 %v1610
        %v1651 = vunpack.c.l.b16 %v1611
        %v1652 = vunpack.c.h.b16 %v1611
        %v1653 = vunpack.c.l.b16 %v1612
        %v1654 = vunpack.c.h.b16 %v1612
        %v1655 = vunpack.c.l.b16 %v1613
        %v1656 = vunpack.c.h.b16 %v1613
        %v1657 = vunpack.c.l.b16 %v1614
        %v1658 = vunpack.c.h.b16 %v1614
        %v1659 = vunpack.c.l.b16 %v1615
        %v1660 = vunpack.c.h.b16 %v1615
        %v1661 = vunpack.c.l.b16 %v1616
        %v1662 = vunpack.c.h.b16 %v1616
        %v1663 = vunpack.c.l.b16 %v1617
        %v1664 = vunpack.c.h.b16 %v1617
        %v1665 = vunpack.c.l.b16 %v1618
        %v1666 = vunpack.c.h.b16 %v1618
        %v1667 = vunpack.c.l.b16 %v1619
        %v1668 = vunpack.c.h.b16 %v1619
        %v1669 = vunpack.c.l.b16 %v1620
        %v1670 = vunpack.c.h.b16 %v1620
        %v1671 = vunpack.c.l.b16 %v1621
        %v1672 = vunpack.c.h.b16 %v1621
        %v1673 = vunpack.c.l.b16 %v1622
        %v1674 = vunpack.c.h.b16 %v1622
        %v1675 = vunpack.c.l.b16 %v1623
        %v1676 = vunpack.c.h.b16 %v1623
        %v1677 = vunpack.c.l.b16 %v1624
        %v1678 = vunpack.c.h.b16 %v1624
        %v1679 = vpack.c.b16 %v1649, %v1647
        %v1680 = vpack.c.b16 %v1650, %v1648
        %v1681 = vpack.c.b16 %v1653, %v1651
        %v1682 = vpack.c.b16 %v1654, %v1652
        %v1683 = vpack.c.b16 %v1657, %v1655
        %v1684 = vpack.c.b16 %v1658, %v1656
        %v1685 = vpack.c.b16 %v1661, %v1659
        %v1686 = vpack.c.b16 %v1662, %v1660
        %v1687 = vpack.c.b16 %v1665, %v1663
        %v1688 = vpack.c.b16 %v1666, %v1664
        %v1689 = vpack.c.b16 %v1669, %v1667
        %v1690 = vpack.c.b16 %v1670, %v1668
        %v1691 = vpack.c.b16 %v1673, %v1671
        %v1692 = vpack.c.b16 %v1674, %v1672
        %v1693 = vpack.c.b16 %v1677, %v1675
        %v1694 = vpack.c.b16 %v1678, %v1676
        %1711 = vmatpush.bf16.msra.mxu0 %v1693
        %1712 = vmatpush.bf16.msra.mxu0 %v1691
        %1713 = vmatpush.bf16.msra.mxu0 %v1689
        %1714 = vmatpush.bf16.msra.mxu0 %v1687
        %1715 = vmatpush.bf16.msra.mxu0 %v1685
        %1716 = vmatpush.bf16.msra.mxu0 %v1683
        %1717 = vmatpush.bf16.msra.mxu0 %v1681
        %1718 = vmatpush.bf16.msra.mxu0 %v1679
        %1719 = vmatmul.bf16.gmra.mxu0 %v1608
        %v1720 = vpop.f32.mrf.mxu0
        %v1721 = vadd.f32 %v1627, %v1720
        %v1722 = vpop.f32.mrf.mxu0
        %v1723 = vadd.f32 %v1627, %v1722
        %1724 = vdwg.mxu0
        %1725 = vmatpush.bf16.msra.mxu0 %v1694
        %1726 = vmatpush.bf16.msra.mxu0 %v1692
        %1727 = vmatpush.bf16.msra.mxu0 %v1690
        %1728 = vmatpush.bf16.msra.mxu0 %v1688
        %1729 = vmatpush.bf16.msra.mxu0 %v1686
        %1730 = vmatpush.bf16.msra.mxu0 %v1684
        %1731 = vmatpush.bf16.msra.mxu0 %v1682
        %1732 = vmatpush.bf16.msra.mxu0 %v1680
        %1733 = vmatmul.bf16.gmra.mxu0 %v1608
        %v1734 = vpop.f32.mrf.mxu0
        %v1735 = vadd.f32 %v1628, %v1734
        %v1736 = vpop.f32.mrf.mxu0
        %v1737 = vadd.f32 %v1628, %v1736
        %1738 = vdwg.mxu0
        %v1739 = vmul.f32 %v1721, %v1721
        %v1740 = vmul.f32 %v1735, %v1735
        %v1741 = vmul.f32 %v1723, %v1723
        %v1742 = vmul.f32 %v1737, %v1737
        %v1743 = vmul.f32 %v1721, %v1739
        %v1744 = vmul.f32 %v1735, %v1740
        %v1745 = vmul.f32 %v1723, %v1741
        %v1746 = vmul.f32 %v1737, %v1742
        %v1747 = vmul.f32 %v1743, 0.044715
        %v1748 = vmul.f32 %v1744, 0.044715
        %v1749 = vmul.f32 %v1745, 0.044715
        %v1750 = vmul.f32 %v1746, 0.044715
        %v1751 = vadd.f32 %v1721, %v1747
        %v1752 = vadd.f32 %v1735, %v1748
        %v1753 = vadd.f32 %v1723, %v1749
        %v1754 = vadd.f32 %v1737, %v1750
        %v1755 = vmul.f32 %v1751, 0.7978846
        %v1756 = vmul.f32 %v1752, 0.7978846
        %v1757 = vmul.f32 %v1753, 0.7978846
        %v1758 = vmul.f32 %v1754, 0.7978846
        %v1759 = vtanh.pop %v1755
        %v1760 = vtanh.pop %v1756
        %v1761 = vtanh.pop %v1757
        %v1762 = vtanh.pop %v1758
        %v1763 = vadd.f32 %v1759, 1.0
        %v1764 = vadd.f32 %v1760, 1.0
        %v1765 = vadd.f32 %v1761, 1.0
        %v1766 = vadd.f32 %v1762, 1.0
        %v1767 = vmul.f32 %v1763, 0.5
        %v1768 = vmul.f32 %v1764, 0.5
        %v1769 = vmul.f32 %v1765, 0.5
        %v1770 = vmul.f32 %v1766, 0.5
        %v1771 = vmul.f32 %v1721, %v1767
        %v1772 = vmul.f32 %v1735, %v1768
        %v1773 = vmul.f32 %v1723, %v1769
        %v1774 = vmul.f32 %v1737, %v1770
        %v1775 = vpack.c.bf16 %v1773, %v1771
        %v1776 = vpack.c.bf16 %v1774, %v1772
        %v1777 = vld [vmem:[%s716] sm:$0xf]
        %v1778 = vld [vmem:[%s716 + $0x4] sm:$0xf]
        %v1779 = vld [vmem:[%s716 + $0x8] sm:$0xf]
        %v1780 = vld [vmem:[%s716 + $0xc] sm:$0xf]
        %v1781 = vld [vmem:[%s716 + $0x10] sm:$0xf]
        %v1782 = vld [vmem:[%s716 + $0x14] sm:$0xf]
        %v1783 = vld [vmem:[%s716 + $0x18] sm:$0xf]
        %v1784 = vld [vmem:[%s716 + $0x1c] sm:$0xf]
        %v1785 = vld [vmem:[%s716 + $0x20] sm:$0xf]
        %v1786 = vld [vmem:[%s716 + $0x24] sm:$0xf]
        %v1787 = vld [vmem:[%s716 + $0x28] sm:$0xf]
        %v1788 = vld [vmem:[%s716 + $0x2c] sm:$0xf]
        %v1789 = vld [vmem:[%s716 + $0x30] sm:$0xf]
        %v1790 = vld [vmem:[%s716 + $0x34] sm:$0xf]
        %v1791 = vld [vmem:[%s716 + $0x38] sm:$0xf]
        %v1792 = vld [vmem:[%s716 + $0x3c] sm:$0xf]
        %v1793 = vld [vmem:[%s716 + $0x40] sm:$0xf]
        %v1794 = vld [vmem:[%s716 + $0x44] sm:$0xf]
        %v1795 = vld [vmem:[%s716 + $0x48] sm:$0xf]
        %v1796 = vld [vmem:[%s716 + $0x4c] sm:$0xf]
        %v1797 = vld [vmem:[%s716 + $0x50] sm:$0xf]
        %v1798 = vld [vmem:[%s716 + $0x54] sm:$0xf]
        %v1799 = vld [vmem:[%s716 + $0x58] sm:$0xf]
        %v1800 = vld [vmem:[%s716 + $0x5c] sm:$0xf]
        %v1801 = vld [vmem:[%s716 + $0x60] sm:$0xf]
        %v1802 = vld [vmem:[%s716 + $0x64] sm:$0xf]
        %v1803 = vld [vmem:[%s716 + $0x68] sm:$0xf]
        %v1804 = vld [vmem:[%s716 + $0x6c] sm:$0xf]
        %v1805 = vld [vmem:[%s716 + $0x70] sm:$0xf]
        %v1806 = vld [vmem:[%s716 + $0x74] sm:$0xf]
        %v1807 = vld [vmem:[%s716 + $0x78] sm:$0xf]
        %v1808 = vld [vmem:[%s716 + $0x7c] sm:$0xf]
        %v1809 = vld [vmem:[%s837] sm:$0x1]
        %v1811 = vperm.slane %v1809, 0
        %v1845 = vunpack.c.l.b16 %v1777
        %v1846 = vunpack.c.l.b16 %v1778
        %v1847 = vunpack.c.l.b16 %v1779
        %v1848 = vunpack.c.l.b16 %v1780
        %v1849 = vunpack.c.l.b16 %v1781
        %v1850 = vunpack.c.l.b16 %v1782
        %v1851 = vunpack.c.l.b16 %v1783
        %v1852 = vunpack.c.l.b16 %v1784
        %v1853 = vunpack.c.l.b16 %v1785
        %v1854 = vunpack.c.l.b16 %v1786
        %v1855 = vunpack.c.l.b16 %v1787
        %v1856 = vunpack.c.l.b16 %v1788
        %v1857 = vunpack.c.l.b16 %v1789
        %v1858 = vunpack.c.l.b16 %v1790
        %v1859 = vunpack.c.l.b16 %v1791
        %v1860 = vunpack.c.l.b16 %v1792
        %v1861 = vunpack.c.l.b16 %v1793
        %v1862 = vunpack.c.l.b16 %v1794
        %v1863 = vunpack.c.l.b16 %v1795
        %v1864 = vunpack.c.l.b16 %v1796
        %v1865 = vunpack.c.l.b16 %v1797
        %v1866 = vunpack.c.l.b16 %v1798
        %v1867 = vunpack.c.l.b16 %v1799
        %v1868 = vunpack.c.l.b16 %v1800
        %v1869 = vunpack.c.l.b16 %v1801
        %v1870 = vunpack.c.l.b16 %v1802
        %v1871 = vunpack.c.l.b16 %v1803
        %v1872 = vunpack.c.l.b16 %v1804
        %v1873 = vunpack.c.l.b16 %v1805
        %v1874 = vunpack.c.l.b16 %v1806
        %v1875 = vunpack.c.l.b16 %v1807
        %v1876 = vunpack.c.l.b16 %v1808
        %v1877 = vpack.c.b16 %v1846, %v1845
        %v1878 = vpack.c.b16 %v1848, %v1847
        %v1879 = vpack.c.b16 %v1850, %v1849
        %v1880 = vpack.c.b16 %v1852, %v1851
        %v1881 = vpack.c.b16 %v1854, %v1853
        %v1882 = vpack.c.b16 %v1856, %v1855
        %v1883 = vpack.c.b16 %v1858, %v1857
        %v1884 = vpack.c.b16 %v1860, %v1859
        %v1885 = vpack.c.b16 %v1862, %v1861
        %v1886 = vpack.c.b16 %v1864, %v1863
        %v1887 = vpack.c.b16 %v1866, %v1865
        %v1888 = vpack.c.b16 %v1868, %v1867
        %v1889 = vpack.c.b16 %v1870, %v1869
        %v1890 = vpack.c.b16 %v1872, %v1871
        %v1891 = vpack.c.b16 %v1874, %v1873
        %v1892 = vpack.c.b16 %v1876, %v1875
        %1909 = vmatpush.bf16.msra.mxu0 %v1884
        %1910 = vmatpush.bf16.msra.mxu0 %v1883
        %1911 = vmatpush.bf16.msra.mxu0 %v1882
        %1912 = vmatpush.bf16.msra.mxu0 %v1881
        %1913 = vmatpush.bf16.msra.mxu0 %v1880
        %1914 = vmatpush.bf16.msra.mxu0 %v1879
        %1915 = vmatpush.bf16.msra.mxu0 %v1878
        %1916 = vmatpush.bf16.msra.mxu0 %v1877
        %1917 = vmatmul.bf16.gmra.mxu0 %v1775
        %v1918 = vpop.f32.mrf.mxu0
        %v1919 = vadd.f32 %v1811, %v1918
        %v1920 = vpop.f32.mrf.mxu0
        %v1921 = vadd.f32 %v1811, %v1920
        %1922 = vdwg.mxu0
        %1923 = vmatpush.bf16.msra.mxu0 %v1892
        %1924 = vmatpush.bf16.msra.mxu0 %v1891
        %1925 = vmatpush.bf16.msra.mxu0 %v1890
        %1926 = vmatpush.bf16.msra.mxu0 %v1889
        %1927 = vmatpush.bf16.msra.mxu0 %v1888
        %1928 = vmatpush.bf16.msra.mxu0 %v1887
        %1929 = vmatpush.bf16.msra.mxu0 %v1886
        %1930 = vmatpush.bf16.msra.mxu0 %v1885
        %1931 = vmatmul.bf16.gmra.mxu0 %v1776
        %v1932 = vpop.f32.mrf.mxu0
        %v1933 = vadd.f32 %v1919, %v1932
        %v1934 = vpop.f32.mrf.mxu0
        %v1935 = vadd.f32 %v1921, %v1934
        %1936 = vdwg.mxu0
        %v1937 = vadd.f32 %v1933, %v1606
        %v1938 = vadd.f32 %v1935, %v1607
        %v1939 = vld [vmem:[%s840] sm:$0x1]
        %v1940 = vld [vmem:[%s843] sm:$0x1]
        %1941 = vadd.xlane.f32.xlu0 %v1937
        %v1942 = vpop.xlane.xlu0 %1941
        %1943 = vadd.xlane.f32.xlu0 %v1938
        %v1944 = vpop.xlane.xlu0 %1943
        %v1945 = vmul.f32 %v1942, %v1557
        %v1946 = vmul.f32 %v1944, %v1557
        %v1947 = vmul.f32 %v1937, %v1937
        %v1948 = vmul.f32 %v1938, %v1938
        %1949 = vadd.xlane.f32.xlu0 %v1947
        %v1950 = vpop.xlane.xlu0 %1949
        %1951 = vadd.xlane.f32.xlu0 %v1948
        %v1952 = vpop.xlane.xlu0 %1951
        %v1953 = vmul.f32 %v1950, %v1557
        %v1954 = vmul.f32 %v1952, %v1557
        %v1955 = vmul.f32 %v1945, %v1945
        %v1956 = vmul.f32 %v1946, %v1946
        %v1957 = vsub.f32 %v1953, %v1955
        %v1958 = vsub.f32 %v1954, %v1956
        %v1959 = vsub.f32 %v1937, %v1945
        %v1960 = vsub.f32 %v1938, %v1946
        %v1961 = vadd.f32 %v1957, 1e-12
        %v1962 = vadd.f32 %v1958, 1e-12
        %v1963 = vrsqrt.pop %v1961
        %v1964 = vmul.f32 %v1963, %v1961
        %v1965 = vmul.f32 %v1964, %v1963
        %v1966 = vmul.f32 0.5, %v1965
        %v1967 = vsub.f32 1.5, %v1966
        %v1968 = vmul.f32 %v1963, %v1967
        %vm1969 = vweird.f32 %v1961
        %vm1970 = vweird.f32 %v1963
        %vm1971 = vmor %vm1969, %vm1970
        %v1972 = vsel %vm1971, %v1963, %v1968
        %v1973 = vrsqrt.pop %v1962
        %v1974 = vmul.f32 %v1973, %v1962
        %v1975 = vmul.f32 %v1974, %v1973
        %v1976 = vmul.f32 0.5, %v1975
        %v1977 = vsub.f32 1.5, %v1976
        %v1978 = vmul.f32 %v1973, %v1977
        %vm1979 = vweird.f32 %v1962
        %vm1980 = vweird.f32 %v1973
        %vm1981 = vmor %vm1979, %vm1980
        %v1982 = vsel %vm1981, %v1973, %v1978
        %v1983 = vmul.f32 %v1959, %v1972
        %v1984 = vmul.f32 %v1960, %v1982
        %v1986 = vperm.slane %v1939, 0
        %v1988 = vmul.f32 %v1983, %v1986
        %v1989 = vmul.f32 %v1984, %v1986
        %v1991 = vperm.slane %v1940, 0
        %v1993 = vadd.f32 %v1988, %v1991
        %v1994 = vadd.f32 %v1989, %v1991
        %1995 = vst [vmem:[#allocation2] sm:$0xff] %v1993
        %1996 = vst [vmem:[#allocation2 + $0x8] sm:$0xff] %v1994
        %p1997 = scmp.eq.s32.totalorder %s38, 1
        // Predicated region
        $region113: #{distilbert_classifier_forward.1} parent=91 // pred_check
          %p1998 = pneg %p1997
        $region114: #{distilbert_classifier_forward.1} parent=91 // pred_check_branch
          %2000 = sbr.rel (%p1998) target = $region116
        $region115: #{distilbert_classifier_forward.1} parent=91 // pred_region
          %v2001 = vpack.c.bf16 %v1994, %v1993
          %v2002 = vld [vmem:[#allocation8] sm:$0xf]
          %v2003 = vld [vmem:[#allocation8 + $0x4] sm:$0xf]
          %v2004 = vld [vmem:[#allocation8 + $0x8] sm:$0xf]
          %v2005 = vld [vmem:[#allocation8 + $0xc] sm:$0xf]
          %v2006 = vld [vmem:[#allocation8 + $0x10] sm:$0xf]
          %v2007 = vld [vmem:[#allocation8 + $0x14] sm:$0xf]
          %v2008 = vld [vmem:[#allocation8 + $0x18] sm:$0xf]
          %v2009 = vld [vmem:[#allocation8 + $0x1c] sm:$0xf]
          %v2010 = vld [vmem:[#allocation8 + $0x20] sm:$0xf]
          %v2011 = vld [vmem:[#allocation8 + $0x24] sm:$0xf]
          %v2012 = vld [vmem:[#allocation8 + $0x28] sm:$0xf]
          %v2013 = vld [vmem:[#allocation8 + $0x2c] sm:$0xf]
          %v2014 = vld [vmem:[#allocation8 + $0x30] sm:$0xf]
          %v2015 = vld [vmem:[#allocation8 + $0x34] sm:$0xf]
          %v2016 = vld [vmem:[#allocation8 + $0x38] sm:$0xf]
          %v2017 = vld [vmem:[#allocation8 + $0x3c] sm:$0xf]
          %v2018 = vld [vmem:[%s17] sm:$0x1]
          %v2020 = vperm.slane %v2018, 0
          %v2038 = vunpack.c.l.b16 %v2002
          %v2039 = vunpack.c.l.b16 %v2003
          %v2040 = vunpack.c.l.b16 %v2004
          %v2041 = vunpack.c.l.b16 %v2005
          %v2042 = vunpack.c.l.b16 %v2006
          %v2043 = vunpack.c.l.b16 %v2007
          %v2044 = vunpack.c.l.b16 %v2008
          %v2045 = vunpack.c.l.b16 %v2009
          %v2046 = vunpack.c.l.b16 %v2010
          %v2047 = vunpack.c.l.b16 %v2011
          %v2048 = vunpack.c.l.b16 %v2012
          %v2049 = vunpack.c.l.b16 %v2013
          %v2050 = vunpack.c.l.b16 %v2014
          %v2051 = vunpack.c.l.b16 %v2015
          %v2052 = vunpack.c.l.b16 %v2016
          %v2053 = vunpack.c.l.b16 %v2017
          %v2054 = vpack.c.b16 %v2039, %v2038
          %v2055 = vpack.c.b16 %v2041, %v2040
          %v2056 = vpack.c.b16 %v2043, %v2042
          %v2057 = vpack.c.b16 %v2045, %v2044
          %v2058 = vpack.c.b16 %v2047, %v2046
          %v2059 = vpack.c.b16 %v2049, %v2048
          %v2060 = vpack.c.b16 %v2051, %v2050
          %v2061 = vpack.c.b16 %v2053, %v2052
          %2070 = vmatpush.bf16.msra.mxu0 %v2061
          %2071 = vmatpush.bf16.msra.mxu0 %v2060
          %2072 = vmatpush.bf16.msra.mxu0 %v2059
          %2073 = vmatpush.bf16.msra.mxu0 %v2058
          %2074 = vmatpush.bf16.msra.mxu0 %v2057
          %2075 = vmatpush.bf16.msra.mxu0 %v2056
          %2076 = vmatpush.bf16.msra.mxu0 %v2055
          %2077 = vmatpush.bf16.msra.mxu0 %v2054
          %2078 = vmatmul.bf16.gmra.mxu0 %v2001
          %v2079 = vpop.f32.mrf.mxu0
          %v2080 = vadd.f32 %v2020, %v2079
          %v2081 = vpop.f32.mrf.mxu0
          %v2082 = vadd.f32 %v2020, %v2081
          %2083 = vdwg.mxu0
          %2084 = vst [vmem:[%s18] sm:$0xff] %v2080
          %2085 = vst [vmem:[%s18 + $0x8] sm:$0xff] %v2082
          %v2086 = vlaneseq
          %v2087 = vand.u32 %v2086, 127
          %vm2088 = vcmp.lt.s32.totalorder %v2087, 2
          %v2089 = vsel %vm2088, %v2080, -1e+30
          %v2090 = vsel %vm2088, %v2082, -1e+30
          %2091 = vmax.xlane.f32.xlu0 %v2089
          %v2092 = vpop.xlane.xlu0 %2091
          %2093 = vmax.xlane.f32.xlu0 %v2090
          %v2094 = vpop.xlane.xlu0 %2093
          %v2095 = vsub.f32 %v2089, %v2092
          %v2096 = vsub.f32 %v2090, %v2094
          %v2097 = vmul.f32 %v2095, 1.442695
          %v2098 = vpow.pop %v2097
          %v2099 = vmul.f32 %v2096, 1.442695
          %v2100 = vpow.pop %v2099
          %2101 = vadd.xlane.f32.xlu0 %v2098
          %v2102 = vpop.xlane.xlu0 %2101
          %2103 = vadd.xlane.f32.xlu0 %v2100
          %v2104 = vpop.xlane.xlu0 %2103
          %v2105 = vrcp.pop %v2102
          %v2106 = vmul.f32 %v2102, %v2105
          %v2107 = vsub.f32 1.0, %v2106
          %v2108 = vmul.f32 %v2105, %v2107
          %v2109 = vadd.f32 %v2105, %v2108
          %vm2110 = vweird.f32 %v2102
          %vm2111 = vweird.f32 %v2105
          %vm2112 = vmor %vm2110, %vm2111
          %v2113 = vsel %vm2112, %v2105, %v2109
          %v2114 = vand.u32 2147483647, %v2102
          %vm2115 = vcmp.eq.f32.partialorder %v2114, 8.507059e+37
          %v2116 = vand.u32 %v2102, 2147483648
          %v2117 = vor.u32 1.1754944e-38, %v2116
          %v2118 = vsel %vm2115, %v2117, %v2113
          %v2119 = vmul.f32 %v2098, %v2118
          %v2120 = vrcp.pop %v2104
          %v2121 = vmul.f32 %v2104, %v2120
          %v2122 = vsub.f32 1.0, %v2121
          %v2123 = vmul.f32 %v2120, %v2122
          %v2124 = vadd.f32 %v2120, %v2123
          %vm2125 = vweird.f32 %v2104
          %vm2126 = vweird.f32 %v2120
          %vm2127 = vmor %vm2125, %vm2126
          %v2128 = vsel %vm2127, %v2120, %v2124
          %v2129 = vand.u32 2147483647, %v2104
          %vm2130 = vcmp.eq.f32.partialorder %v2129, 8.507059e+37
          %v2131 = vand.u32 %v2104, 2147483648
          %v2132 = vor.u32 1.1754944e-38, %v2131
          %v2133 = vsel %vm2130, %v2132, %v2128
          %v2134 = vmul.f32 %v2100, %v2133
          %2135 = vst [vmem:[%s19] sm:$0xff] %v2119
          %2136 = vst [vmem:[%s19 + $0x8] sm:$0xff] %v2134
        $region116: #{distilbert_classifier_forward.1} parent=91 // pred_fallthru
          _
        // Predicated region
        $region117: #{distilbert_classifier_forward.1} parent=91 // pred_check
          %p2137 = pneg %p489
        $region118: #{distilbert_classifier_forward.1} parent=91 // pred_check_branch
          %2139 = sbr.rel (%p2137) target = $region120
        $region119: #{distilbert_classifier_forward.1} parent=91 // pred_region
          _
        $region120: #{distilbert_classifier_forward.1} parent=91 // pred_fallthru
          _
        // Predicated region
        $region121: #{distilbert_classifier_forward.1} parent=91 // pred_check
          %p2140 = pneg %p510
        $region122: #{distilbert_classifier_forward.1} parent=91 // pred_check_branch
          %2142 = sbr.rel (%p2140) target = $region124
        $region123: #{distilbert_classifier_forward.1} parent=91 // pred_region
          _
        $region124: #{distilbert_classifier_forward.1} parent=91 // pred_fallthru
          _
        // Predicated region
        $region125: #{distilbert_classifier_forward.1} parent=91 // pred_check
          %p2143 = pneg %p489
        $region126: #{distilbert_classifier_forward.1} parent=91 // pred_check_branch
          %2145 = sbr.rel (%p2143) target = $region128
        $region127: #{distilbert_classifier_forward.1} parent=91 // pred_region
          _
        $region128: #{distilbert_classifier_forward.1} parent=91 // pred_fallthru
          _
        // Predicated region
        $region129: #{distilbert_classifier_forward.1} parent=91 // pred_check
          %p2146 = pneg %p510
        $region130: #{distilbert_classifier_forward.1} parent=91 // pred_check_branch
          %2148 = sbr.rel (%p2146) target = $region132
        $region131: #{distilbert_classifier_forward.1} parent=91 // pred_region
          _
        $region132: #{distilbert_classifier_forward.1} parent=91 // pred_fallthru
          _
      $region92: #{distilbert_classifier_forward.1} parent=5 // pred_fallthru
        _
      %p2149 = scmp.le.s32.totalorder 2, %s33
      // Predicated region
      $region133: #{distilbert_classifier_forward.1} parent=5 // pred_check
        %p2150 = pneg %p2149
      $region134: #{distilbert_classifier_forward.1} parent=5 // pred_check_branch
        %2152 = sbr.rel (%p2150) target = $region136
      $region135: #{distilbert_classifier_forward.1} parent=5 // pred_region
        %s2153 = ssub.s32 %s33, 2
      $region136: #{distilbert_classifier_forward.1} parent=5 // pred_fallthru
        _
    $region6: #{distilbert_classifier_forward.1} parent=1 // loop_footer
      %s37 = sadd.s32 1, %s33
    $region7: #{distilbert_classifier_forward.1} parent=1 // loop_footer_branch
      %32 = sbr.rel target = $region3
    $region8: #{distilbert_classifier_forward.1} parent=1 // loop_exit
      _
    %2154 = vsyncpa [#allocation4], 1
    %s2155 = scalar_lea.sflag [#allocation4], 1
    %2156 = vsyncpa %s2155, 1
    %2157 = vsyncpa [#allocation6], 1
    %s2158 = scalar_lea.sflag [#allocation6], 1
    %2159 = vsyncpa %s2158, 1
    %2160 = vsyncpa [#allocation9], 1

</llo_original>
